<compile_context>
chip_gen: v7x
topology: tpu7x:2x2x1
jax: 0.10.0
libtpu: 0.0.40
codegen_flags: <defaults>
</compile_context>

<pallas_src>
import functools
import warnings

import jax
import jax.numpy as jnp
from jax.experimental import pallas as pl
from jax.experimental.pallas import tpu as pltpu

warnings.filterwarnings("ignore", message=".*donated buffers.*")


def _round_up(x, m):
    return (x + m - 1) // m * m


# ----------------------------------------------------------------------------
# Pallas kernels
# ----------------------------------------------------------------------------
def _matmul_kernel(*refs, prologue, has_esc, has_ebi, act):
    """acc += (relu(a*psc+pbi) if prologue else a) @ b ; fused epilogue."""
    it = iter(refs)
    a_ref, b_ref = next(it), next(it)
    psc_ref = next(it) if prologue else None
    pbi_ref = next(it) if prologue else None
    esc_ref = next(it) if has_esc else None
    ebi_ref = next(it) if has_ebi else None
    o_ref, acc_ref = next(it), next(it)

    @pl.when(pl.program_id(2) == 0)
    def _():
        acc_ref[...] = jnp.zeros_like(acc_ref)

    a = a_ref[...]
    if prologue:
        # BN + ReLU on the A tile (f32 math, single down-cast for the bf16 MXU).
        a = jnp.maximum(a.astype(jnp.float32) * psc_ref[...] + pbi_ref[...],
                        0.0).astype(jnp.bfloat16)
    acc_ref[...] += jnp.dot(a, b_ref[...], preferred_element_type=jnp.float32)

    @pl.when(pl.program_id(2) == pl.num_programs(2) - 1)
    def _():
        y = acc_ref[...]
        if has_esc:
            y = y * esc_ref[...]
        if has_ebi:
            y = y + ebi_ref[...]
        if act == "relu":
            y = jnp.maximum(y, 0.0)
        elif act == "sigmoid":
            y = 1.0 / (1.0 + jnp.exp(-y))
        o_ref[...] = y.astype(o_ref.dtype)


def _conv3x3_kernel(x_ref, w_ref, o_ref, *, n_rows, wp2, cin):
    """3x3/s1/p1 conv for one image: 9 shifted-window matmuls from VMEM.

    x_ref: (1, R, cin) spatially padded, row-major flattened image.
    w_ref: (9*cin, cout), tap-major (kh, kw, cin) row ordering.
    Output row r corresponds to padded coord r + wp2 + 1; valid rows are
    r = oh*wp2 + ow for oh<H, ow<W and are extracted by the wrapper.
    """
    cout = o_ref.shape[-1]
    acc = jnp.zeros((n_rows, cout), jnp.float32)
    for di in range(3):
        for dj in range(3):
            off = di * wp2 + dj                      # static shift per tap
            a = x_ref[0, off:off + n_rows, :]
            wk = w_ref[(di * 3 + dj) * cin:(di * 3 + dj + 1) * cin, :]
            acc = acc + jnp.dot(a, wk, preferred_element_type=jnp.float32)
    o_ref[...] = acc[None].astype(o_ref.dtype)


def _gap_bn_relu_kernel(x_ref, s_ref, b_ref, o_ref, *, inv_hw):
    # NOTE: correct only because the full H*W extent lives in this one block.
    y = jnp.maximum(x_ref[...].astype(jnp.float32) * s_ref[...] + b_ref[...],
                    0.0)
    o_ref[...] = (jnp.sum(y, axis=1, keepdims=True) * inv_hw).astype(o_ref.dtype)


# ----------------------------------------------------------------------------
# Pallas wrappers (called only inside jitted stage functions)
# ----------------------------------------------------------------------------
def pallas_matmul_fused(a, b, psc=None, pbi=None, esc=None, ebi=None, *,
                        act="none"):
    """act( (relu(a*psc+pbi) if psc else a) @ b [* esc] [+ ebi] ).

    a: (M, Ka), b: (K, N) with K <= Ka (reads only the first K columns of a;
    K must be a multiple of 128 or equal Ka).  bf16 MXU, f32 accumulation.
    """
    M, Ka = a.shape
    K, N = b.shape
    assert K <= Ka and (K == Ka or K % 128 == 0)
    prologue = psc is not None
    has_esc = esc is not None
    has_ebi = ebi is not None

    a = a.astype(jnp.bfloat16)
    b = b.astype(jnp.bfloat16)

    if M <= 512:
        Mp = _round_up(M, 8)                      # single full-extent M tile
        tm = Mp
        a_in = a if Mp == M else jnp.pad(a, ((0, Mp - M), (0, 0)))
    else:
        # TODO(synk): pick tm dividing M (or support a ragged last tile) to
        # avoid this pad copy for large images.
        tm = 512
        Mp = _round_up(M, tm)
        a_in = jnp.pad(a, ((0, Mp - M), (0, 0)))
    tk, tn = K, N                                 # single K tile, single N tile

    operands = [a_in, b]
    in_specs = [
        pl.BlockSpec((tm, tk), lambda i, j, k: (i, k)),
        pl.BlockSpec((tk, tn), lambda i, j, k: (k, j)),
    ]
    if prologue:
        operands += [psc.astype(jnp.float32).reshape(1, K),
                     pbi.astype(jnp.float32).reshape(1, K)]
        in_specs += [pl.BlockSpec((1, tk), lambda i, j, k: (0, k)),
                     pl.BlockSpec((1, tk), lambda i, j, k: (0, k))]
    if has_esc:
        operands.append(esc.astype(jnp.float32).reshape(1, N))
        in_specs.append(pl.BlockSpec((1, tn), lambda i, j, k: (0, j)))
    if has_ebi:
        operands.append(ebi.astype(jnp.float32).reshape(1, N))
        in_specs.append(pl.BlockSpec((1, tn), lambda i, j, k: (0, j)))

    out = pl.pallas_call(
        functools.partial(_matmul_kernel, prologue=prologue, has_esc=has_esc,
                          has_ebi=has_ebi, act=act),
        out_shape=jax.ShapeDtypeStruct((Mp, N), jnp.bfloat16),
        grid_spec=pltpu.PrefetchScalarGridSpec(
            num_scalar_prefetch=0,
            grid=(Mp // tm, 1, 1),
            in_specs=in_specs,
            out_specs=pl.BlockSpec((tm, tn), lambda i, j, k: (i, j)),
            scratch_shapes=[pltpu.VMEM((tm, tn), jnp.float32)],
        ),
        compiler_params=pltpu.CompilerParams(
            dimension_semantics=("parallel", "parallel", "arbitrary")),
    )(*operands)
    return out if Mp == M else out[:M]


def pallas_conv3x3(x, w):
    """3x3, stride 1, pad 1 conv (NHWC, no bias) without any HBM im2col."""
    N, H, W, C = x.shape
    cout = w.shape[1]
    wp2 = W + 2
    n_rows = _round_up(H * wp2, 8)
    need = n_rows + 2 * wp2 + 2                   # rows the taps may touch
    rows_pad = max(H + 2, -(-need // wp2))        # 1 top pad + H + bottom pad
    bottom = rows_pad - H - 1
    xp = jnp.pad(x, ((0, 0), (1, bottom), (1, 1), (0, 0)))
    xf = xp.reshape(N, rows_pad * wp2, C)

    out = pl.pallas_call(
        functools.partial(_conv3x3_kernel, n_rows=n_rows, wp2=wp2, cin=C),
        out_shape=jax.ShapeDtypeStruct((N, n_rows, cout), jnp.bfloat16),
        grid=(N,),
        in_specs=[
            pl.BlockSpec((1, rows_pad * wp2, C), lambda n: (n, 0, 0)),
            pl.BlockSpec((9 * C, cout), lambda n: (0, 0)),
        ],
        out_specs=pl.BlockSpec((1, n_rows, cout), lambda n: (n, 0, 0)),
        compiler_params=pltpu.CompilerParams(
            dimension_semantics=("parallel",)),
    )(xf, w.astype(jnp.bfloat16))

    # valid output rows are r = oh*wp2 + ow (ow < W)
    out = out[:, :H * wp2, :].reshape(N, H, wp2, cout)[:, :, :W, :]
    return out


def pallas_gap_bn_relu(x, scale, bias):
    """NHWC -> (N, C): mean over H,W of relu(x * scale + bias)."""
    N, H, W, C = x.shape
    HW = H * W
    xr = x.astype(jnp.bfloat16).reshape(N, HW, C)
    s = scale.astype(jnp.float32).reshape(1, 1, C)
    b = bias.astype(jnp.float32).reshape(1, 1, C)
    out = pl.pallas_call(
        functools.partial(_gap_bn_relu_kernel, inv_hw=1.0 / HW),
        out_shape=jax.ShapeDtypeStruct((N, 1, C), jnp.bfloat16),
        grid=(N,),
        in_specs=[pl.BlockSpec((1, HW, C), lambda n: (n, 0, 0)),
                  pl.BlockSpec((1, 1, C), lambda n: (0, 0, 0)),
                  pl.BlockSpec((1, 1, C), lambda n: (0, 0, 0))],
        out_specs=pl.BlockSpec((1, 1, C), lambda n: (n, 0, 0)),
        compiler_params=pltpu.CompilerParams(
            dimension_semantics=("parallel",)),
    )(xr, s, b)
    return out[:, 0, :]


# ----------------------------------------------------------------------------
# JAX glue (layout / stem im2col / cheap pooling)
# ----------------------------------------------------------------------------
def _conv_out(H, W, k, s, p):
    return (H + 2 * p - k) // s + 1, (W + 2 * p - k) // s + 1


def _im2col(x, ksize, stride, pad):
    # TODO(synk): used only for the one 7x7 stem conv; dense-layer 3x3 convs
    # use pallas_conv3x3 and never build an im2col tensor.
    N, H, W, C = x.shape
    Ho, Wo = _conv_out(H, W, ksize, stride, pad)
    xpad = jnp.pad(x, ((0, 0), (pad, pad), (pad, pad), (0, 0)))
    cols = []
    for i in range(ksize):
        for j in range(ksize):
            cols.append(xpad[:, i:i + stride * Ho:stride,
                             j:j + stride * Wo:stride, :])
    return jnp.concatenate(cols, axis=-1).reshape(N * Ho * Wo,
                                                  ksize * ksize * C)


def _maxpool_3x3_s2_p1(x):
    # TODO(synk): small fixed-window pooling kept in XLA glue (not hot path).
    return jax.lax.reduce_window(
        x, jnp.array(-jnp.inf, x.dtype), jax.lax.max,
        (1, 3, 3, 1), (1, 2, 2, 1),
        padding=((0, 0), (1, 1), (1, 1), (0, 0)))


def _avgpool_2x2(x):
    N, H, W, C = x.shape
    y = x.astype(jnp.float32).reshape(N, H // 2, 2, W // 2, 2, C).mean(
        axis=(2, 4))
    return y.astype(jnp.bfloat16)


# ----------------------------------------------------------------------------
# Jitted network stages
# ----------------------------------------------------------------------------
@jax.jit
def stem_forward(x_nchw, w0, n0s, n0b):
    x = jnp.transpose(x_nchw, (0, 2, 3, 1)).astype(jnp.bfloat16)   # -> NHWC
    N, H, W, _ = x.shape
    Ho, Wo = _conv_out(H, W, 7, 2, 3)
    a = _im2col(x, 7, 2, 3)                                        # (M, 147)
    y = pallas_matmul_fused(a, w0, esc=n0s, ebi=n0b, act="relu")   # BN0+ReLU
    y = y.reshape(N, Ho, Wo, w0.shape[1])
    return _maxpool_3x3_s2_p1(y)


@functools.partial(jax.jit, donate_argnums=(0,))
def dense_layer(slab, c_live, w1, n1s, n1b, n2s, n2b, w2):
    """One DenseNet bottleneck layer operating in-place on the channel slab."""
    N, H, W, Cs = slab.shape
    a = slab.reshape(N * H * W, Cs)
    # 1x1 bottleneck: fused [BN1+ReLU] prologue and [BN2+ReLU] epilogue.
    # Reads only the first w1.shape[0] slab channels; padded channels are zero
    # in both the slab and the weight rows / BN vectors, so they are inert.
    h = pallas_matmul_fused(a, w1, psc=n1s, pbi=n1b, esc=n2s, ebi=n2b,
                            act="relu")
    h = h.reshape(N, H, W, w1.shape[1])
    h = pallas_conv3x3(h, w2)                                       # (N,H,W,32)
    return jax.lax.dynamic_update_slice_in_dim(slab, h, c_live, axis=3)


@jax.jit
def transition_forward(slab, ns, nb, w):
    N, H, W, Cs = slab.shape
    a = slab.reshape(N * H * W, Cs)
    # Transition: fused [BN+ReLU] prologue into the 1x1 conv, then 2x2 avgpool.
    y = pallas_matmul_fused(a, w, psc=ns, pbi=nb)
    y = y.reshape(N, H, W, w.shape[1])
    return _avgpool_2x2(y)


@jax.jit
def head_forward(slab, n5s, n5b, wc, bc, wp, bpred):
    feat = pallas_gap_bn_relu(slab, n5s, n5b)                 # (N, 1664)
    logits = pallas_matmul_fused(feat, wc, ebi=bc)            # (N, 1024 padded)
    out = pallas_matmul_fused(logits, wp, ebi=bpred, act="sigmoid")   # (N, 8)
    return out.astype(jnp.float32)


# ----------------------------------------------------------------------------
# Deterministic synthetic parameters (shapes of torchvision densenet169),
# pre-padded to MXU-friendly extents at init time.
# ----------------------------------------------------------------------------
class ParamGen:
    def __init__(self, seed=0):
        self._key = jax.random.PRNGKey(seed)
        self._i = 0

    def _next(self):
        self._i += 1
        return jax.random.fold_in(self._key, self._i)

    def conv(self, kh, kw, cin, cout, k_pad=None):
        fan_in = kh * kw * cin
        w = jax.random.normal(self._next(), (kh, kw, cin, cout),
                              jnp.float32) * (2.0 / fan_in) ** 0.5
        w = w.reshape(kh * kw * cin, cout)
        if k_pad is not None and k_pad > w.shape[0]:
            w = jnp.pad(w, ((0, k_pad - w.shape[0]), (0, 0)))   # zero rows
        return w.astype(jnp.bfloat16)

    def bn(self, c, pad_to=None):
        # Inference-mode BatchNorm folded into per-channel scale/bias.
        gamma = 1.0 + 0.1 * jax.random.normal(self._next(), (c,), jnp.float32)
        beta = 0.1 * jax.random.normal(self._next(), (c,), jnp.float32)
        mean = 0.1 * jax.random.normal(self._next(), (c,), jnp.float32)
        var = 1.0 + 0.1 * jnp.abs(
            jax.random.normal(self._next(), (c,), jnp.float32))
        scale = gamma * jax.lax.rsqrt(var + 1e-5)
        bias = beta - mean * scale
        if pad_to is not None and pad_to > c:
            # zero padding keeps padded slab channels exactly zero after the
            # fused prologue (zero-padding invariant).
            scale = jnp.pad(scale, (0, pad_to - c))
            bias = jnp.pad(bias, (0, pad_to - c))
        return scale, bias

    def linear(self, cin, cout, k_pad=None, n_pad=None):
        bound = 1.0 / (cin ** 0.5)
        w = jax.random.uniform(self._next(), (cin, cout), jnp.float32,
                               -bound, bound)
        b = jax.random.uniform(self._next(), (cout,), jnp.float32,
                               -bound, bound)
        if k_pad is not None and k_pad > cin:
            w = jnp.pad(w, ((0, k_pad - cin), (0, 0)))
        if n_pad is not None and n_pad > cout:
            w = jnp.pad(w, ((0, 0), (0, n_pad - cout)))
            b = jnp.pad(b, (0, n_pad - cout))
        return w.astype(jnp.bfloat16), b


def init_densenet169_params(seed=0):
    pg = ParamGen(seed)
    growth, bn_size = 32, 4
    block_config = (6, 12, 32, 32)                  # DenseNet-169
    params = {"conv0": pg.conv(7, 7, 3, 64)}
    params["n0s"], params["n0b"] = pg.bn(64)
    nf = 64
    blocks, transitions = [], []
    for bi, n_layers in enumerate(block_config):
        layers = []
        for i in range(n_layers):
            cin = nf + i * growth
            kp = _round_up(cin, 128)
            n1s, n1b = pg.bn(cin, pad_to=kp)
            n2s, n2b = pg.bn(bn_size * growth)
            layers.append({
                "n1s": n1s, "n1b": n1b,
                "w1": pg.conv(1, 1, cin, bn_size * growth, k_pad=kp),
                "n2s": n2s, "n2b": n2b,
                "w2": pg.conv(3, 3, bn_size * growth, growth),
            })
        blocks.append(layers)
        nf += n_layers * growth
        if bi != len(block_config) - 1:
            ns, nb = pg.bn(nf)
            transitions.append({"ns": ns, "nb": nb,
                                "conv": pg.conv(1, 1, nf, nf // 2)})
            nf //= 2
    params["blocks"] = blocks
    params["transitions"] = transitions
    params["n5s"], params["n5b"] = pg.bn(nf)                        # nf == 1664
    params["wc"], params["bc"] = pg.linear(nf, 1000, n_pad=1024)    # classifier
    params["wp"], params["bp"] = pg.linear(1000, 8, k_pad=1024)     # head+sigmoid
    return params


# ----------------------------------------------------------------------------
# Forward pass
# ----------------------------------------------------------------------------
def densenet169_forward(x_nchw, params):
    # Stem: conv7x7/s2 + BN0 + ReLU (fused epilogue) + maxpool3x3/s2.
    y = stem_forward(x_nchw, params["conv0"], params["n0s"], params["n0b"])

    out = None
    n_blocks = len(params["blocks"])
    for bi in range(n_blocks):
        layers = params["blocks"][bi]
        c_live = y.shape[-1]
        c_slab = _round_up(c_live + 32 * len(layers), 128)
        # Channel-padded feature slab for this block (zeros beyond live chans).
        slab = jnp.pad(y, ((0, 0), (0, 0), (0, 0), (0, c_slab - c_live)))
        for lp in layers:
            slab = dense_layer(slab, c_live, lp["w1"], lp["n1s"], lp["n1b"],
                               lp["n2s"], lp["n2b"], lp["w2"])
            c_live += 32
        if bi < n_blocks - 1:
            tp = params["transitions"][bi]
            y = transition_forward(slab, tp["ns"], tp["nb"], tp["conv"])
        else:
            # Final BN + ReLU fused into the global-average-pool kernel, then
            # classifier (Linear 1664->1000) and prediction (Linear 1000->8,
            # Sigmoid), both padded to 1024 wide internally.
            out = head_forward(slab, params["n5s"], params["n5b"],
                               params["wc"], params["bc"],
                               params["wp"], params["bp"])
    return out


if __name__ == "__main__":
    key = jax.random.PRNGKey(0)
    x = jax.random.normal(key, (2, 3, 32, 32), jnp.float32)   # NCHW, small
    params = init_densenet169_params(seed=0)
    out = densenet169_forward(x, params)
    out = jax.block_until_ready(out)
    assert out.shape == (2, 8)
    assert bool(jnp.all(jnp.isfinite(out)))
    assert bool(jnp.all((out >= 0.0) & (out <= 1.0)))   # sigmoid range
    print("KERNEL_OK")
</pallas_src>

<mosaic_0001>
module attributes {stable_mosaic.version = 11 : i64} {
  func.func @_matmul_kernel(%arg0: i32, %arg1: i32, %arg2: i32, %arg3: memref<512x147xbf16, #tpu.memory_space<vmem>>, %arg4: memref<147x64xbf16, #tpu.memory_space<vmem>>, %arg5: memref<1x64xf32, #tpu.memory_space<vmem>>, %arg6: memref<1x64xf32, #tpu.memory_space<vmem>>, %arg7: memref<512x64xbf16, #tpu.memory_space<vmem>>, %arg8: memref<512x64xf32, #tpu.memory_space<vmem>>) attributes {dimension_semantics = [#tpu.dimension_semantics<parallel>, #tpu.dimension_semantics<parallel>, #tpu.dimension_semantics<arbitrary>], iteration_bounds = array<i64: 1, 1, 1>, scalar_prefetch = 0 : i64, scratch_operands = 1 : i64, tpu.core_type = #tpu.core_type<tc>, window_params = [{transform_indices = @transform_0, window_bounds = array<i64: 512, 147>}, {transform_indices = @transform_1, window_bounds = array<i64: 147, 64>}, {transform_indices = @transform_2, window_bounds = array<i64: 1, 64>}, {transform_indices = @transform_3, window_bounds = array<i64: 1, 64>}, {transform_indices = @transform_4, window_bounds = array<i64: 512, 64>}]} {
    %c0_i32 = arith.constant 0 : i32
    %0 = arith.cmpi eq, %arg2, %c0_i32 : i32
    %1 = arith.extui %0 : i1 to i32
    %c0_i32_0 = arith.constant 0 : i32
    %2 = arith.cmpi ne, %1, %c0_i32_0 : i32
    scf.if %2 {
      %cst_10 = arith.constant 0.000000e+00 : f32
      %12 = vector.broadcast %cst_10 : f32 to vector<512x64xf32>
      %c0_11 = arith.constant 0 : index
      %c0_12 = arith.constant 0 : index
      %13 = vector.load %arg8[%c0_11, %c0_12] : memref<512x64xf32, #tpu.memory_space<vmem>>, vector<512x64xf32>
      tpu.vector_store %arg8[%c0_11, %c0_12], %12 {strides = array<i32>} : memref<512x64xf32, #tpu.memory_space<vmem>>, vector<512x64xf32>,
    } else {
    }
    %c0 = arith.constant 0 : index
    %c0_1 = arith.constant 0 : index
    %3 = vector.load %arg3[%c0, %c0_1] : memref<512x147xbf16, #tpu.memory_space<vmem>>, vector<512x147xbf16>
    %c0_2 = arith.constant 0 : index
    %c0_3 = arith.constant 0 : index
    %4 = vector.load %arg8[%c0_2, %c0_3] : memref<512x64xf32, #tpu.memory_space<vmem>>, vector<512x64xf32>
    %c0_4 = arith.constant 0 : index
    %c0_5 = arith.constant 0 : index
    %5 = vector.load %arg4[%c0_4, %c0_5] : memref<147x64xbf16, #tpu.memory_space<vmem>>, vector<147x64xbf16>
    %cst = arith.constant dense<0.000000e+00> : vector<512x64xf32>
    %6 = tpu.matmul %3, %5, %cst {dimension_numbers = #tpu.dot_dimension_numbers<[1], [0], [0], [1], [0, 0, 1, 1], [], []>} : vector<512x147xbf16>, vector<147x64xbf16>, vector<512x64xf32> -> vector<512x64xf32>
    %7 = arith.addf %4, %6 : vector<512x64xf32>
    %c0_6 = arith.constant 0 : index
    %c0_7 = arith.constant 0 : index
    %8 = vector.load %arg8[%c0_6, %c0_7] : memref<512x64xf32, #tpu.memory_space<vmem>>, vector<512x64xf32>
    tpu.vector_store %arg8[%c0_6, %c0_7], %7 {strides = array<i32>} : memref<512x64xf32, #tpu.memory_space<vmem>>, vector<512x64xf32>,
    %c0_i32_8 = arith.constant 0 : i32
    %9 = arith.cmpi eq, %arg2, %c0_i32_8 : i32
    %10 = arith.extui %9 : i1 to i32
    %c0_i32_9 = arith.constant 0 : i32
    %11 = arith.cmpi ne, %10, %c0_i32_9 : i32
    scf.if %11 {
      %c0_10 = arith.constant 0 : index
      %c0_11 = arith.constant 0 : index
      %12 = vector.load %arg8[%c0_10, %c0_11] : memref<512x64xf32, #tpu.memory_space<vmem>>, vector<512x64xf32>
      %c0_12 = arith.constant 0 : index
      %c0_13 = arith.constant 0 : index
      %13 = vector.load %arg5[%c0_12, %c0_13] : memref<1x64xf32, #tpu.memory_space<vmem>>, vector<1x64xf32>
      %14 = vector.broadcast %13 : vector<1x64xf32> to vector<512x64xf32>
      %15 = arith.mulf %12, %14 : vector<512x64xf32>
      %c0_14 = arith.constant 0 : index
      %c0_15 = arith.constant 0 : index
      %16 = vector.load %arg6[%c0_14, %c0_15] : memref<1x64xf32, #tpu.memory_space<vmem>>, vector<1x64xf32>
      %17 = vector.broadcast %16 : vector<1x64xf32> to vector<512x64xf32>
      %18 = arith.addf %15, %17 : vector<512x64xf32>
      %cst_16 = arith.constant 0.000000e+00 : f32
      %19 = vector.broadcast %cst_16 : f32 to vector<512x64xf32>
      %20 = arith.maximumf %18, %19 : vector<512x64xf32>
      %21 = arith.truncf %20 : vector<512x64xf32> to vector<512x64xbf16>
      %c0_17 = arith.constant 0 : index
      %c0_18 = arith.constant 0 : index
      %22 = vector.load %arg7[%c0_17, %c0_18] : memref<512x64xbf16, #tpu.memory_space<vmem>>, vector<512x64xbf16>
      tpu.vector_store %arg7[%c0_17, %c0_18], %21 {strides = array<i32>} : memref<512x64xbf16, #tpu.memory_space<vmem>>, vector<512x64xbf16>,
    } else {
    }
    return
  }
  func.func @transform_0(%arg0: i32, %arg1: i32, %arg2: i32) -> (i32, i32) {
    %c0_i32 = arith.constant 0 : i32
    return %arg0, %arg2 : i32, i32
  }
  func.func @transform_1(%arg0: i32, %arg1: i32, %arg2: i32) -> (i32, i32) {
    %c0_i32 = arith.constant 0 : i32
    return %arg2, %arg1 : i32, i32
  }
  func.func @transform_2(%arg0: i32, %arg1: i32, %arg2: i32) -> (i32, i32) {
    %c0_i32 = arith.constant 0 : i32
    %c0_i32_0 = arith.constant 0 : i32
    return %c0_i32, %arg1 : i32, i32
  }
  func.func @transform_3(%arg0: i32, %arg1: i32, %arg2: i32) -> (i32, i32) {
    %c0_i32 = arith.constant 0 : i32
    %c0_i32_0 = arith.constant 0 : i32
    return %c0_i32, %arg1 : i32, i32
  }
  func.func @transform_4(%arg0: i32, %arg1: i32, %arg2: i32) -> (i32, i32) {
    %c0_i32 = arith.constant 0 : i32
    return %arg0, %arg1 : i32, i32
  }
}

</mosaic_0001>

<llo_original>
// kernel: stem_forward.1
$region0: #{stem_forward.1}
  #allocation0 [shape = 'u32[]', space=smem, size = 0x4, offset = 0x4, fixed_abs, tag = 'smem constant byte address 0x4 - core index']
  #allocation1 [shape = 'u32[144,128]{1,0:T(1,128)}', space=vmem, size = 0x12000, scoped, tag = 'internal scratch']
  #allocation2 [shape = 'f32[512,64]{1,0:T(8,128)}', space=vmem, size = 0x40000, scoped, tag = 'scratch operand']
  %s0 = inlined_call_operand.vmem [shape: bf16[512,147], index: 0, kind: input, shape index: {}]
  %s1 = inlined_call_operand.vmem [shape: bf16[147,64], index: 1, kind: input, shape index: {}]
  %s2 = inlined_call_operand.vmem [shape: f32[1,64], index: 2, kind: input, shape index: {}]
  %s3 = inlined_call_operand.vmem [shape: f32[1,64], index: 3, kind: input, shape index: {}]
  %s4 = inlined_call_operand.vmem [shape: bf16[512,64], index: 4, kind: output, shape index: {}]
  %s5 = sld [smem:[#allocation0]]
  $region34: #{stem_forward.1} parent=0
    _
  %s7 = ssub.s32 1, %s5
  %s8 = scalar_select 0, %s7, %s5
  // Predicated region
  $region2: #{stem_forward.1} parent=0 // pred_check
    _
  $region3: #{stem_forward.1} parent=0 // pred_check_branch
    %10 = sbr.rel (0) target = $region5
  $region4: #{stem_forward.1} parent=0 // pred_region
    _
  $region5: #{stem_forward.1} parent=0 // pred_fallthru
    _
  // Predicated region
  $region6: #{stem_forward.1} parent=0 // pred_check
    _
  $region7: #{stem_forward.1} parent=0 // pred_check_branch
    %12 = sbr.rel (0) target = $region9
  $region8: #{stem_forward.1} parent=0 // pred_region
    _
  $region9: #{stem_forward.1} parent=0 // pred_fallthru
    _
  // Predicated region
  $region10: #{stem_forward.1} parent=0 // pred_check
    _
  $region11: #{stem_forward.1} parent=0 // pred_check_branch
    %14 = sbr.rel (0) target = $region13
  $region12: #{stem_forward.1} parent=0 // pred_region
    _
  $region13: #{stem_forward.1} parent=0 // pred_fallthru
    _
  // Predicated region
  $region14: #{stem_forward.1} parent=0 // pred_check
    _
  $region15: #{stem_forward.1} parent=0 // pred_check_branch
    %16 = sbr.rel (0) target = $region17
  $region16: #{stem_forward.1} parent=0 // pred_region
    _
  $region17: #{stem_forward.1} parent=0 // pred_fallthru
    _
  %p18 = scmp.eq.s32.totalorder 0, 0
  // Predicated region
  $region18: #{stem_forward.1} parent=0 // pred_check
    %p19 = pneg %p18
  $region19: #{stem_forward.1} parent=0 // pred_check_branch
    %21 = sbr.rel (%p19) target = $region21
  $region20: #{stem_forward.1} parent=0 // pred_region
    %vm22 = vcmask 523264
    %23 = vst.msk [vmem:[#allocation2] sm:$0xff] %vm22, 0.0
    %24 = vst.msk [vmem:[#allocation2 + $0x8] sm:$0xff] %vm22, 0.0
    %25 = vst.msk [vmem:[#allocation2 + $0x10] sm:$0xff] %vm22, 0.0
    %26 = vst.msk [vmem:[#allocation2 + $0x18] sm:$0xff] %vm22, 0.0
    %27 = vst.msk [vmem:[#allocation2 + $0x20] sm:$0xff] %vm22, 0.0
    %28 = vst.msk [vmem:[#allocation2 + $0x28] sm:$0xff] %vm22, 0.0
    %29 = vst.msk [vmem:[#allocation2 + $0x30] sm:$0xff] %vm22, 0.0
    %30 = vst.msk [vmem:[#allocation2 + $0x38] sm:$0xff] %vm22, 0.0
    %31 = vst.msk [vmem:[#allocation2 + $0x40] sm:$0xff] %vm22, 0.0
    %32 = vst.msk [vmem:[#allocation2 + $0x48] sm:$0xff] %vm22, 0.0
    %33 = vst.msk [vmem:[#allocation2 + $0x50] sm:$0xff] %vm22, 0.0
    %34 = vst.msk [vmem:[#allocation2 + $0x58] sm:$0xff] %vm22, 0.0
    %35 = vst.msk [vmem:[#allocation2 + $0x60] sm:$0xff] %vm22, 0.0
    %36 = vst.msk [vmem:[#allocation2 + $0x68] sm:$0xff] %vm22, 0.0
    %37 = vst.msk [vmem:[#allocation2 + $0x70] sm:$0xff] %vm22, 0.0
    %38 = vst.msk [vmem:[#allocation2 + $0x78] sm:$0xff] %vm22, 0.0
    %39 = vst.msk [vmem:[#allocation2 + $0x80] sm:$0xff] %vm22, 0.0
    %40 = vst.msk [vmem:[#allocation2 + $0x88] sm:$0xff] %vm22, 0.0
    %41 = vst.msk [vmem:[#allocation2 + $0x90] sm:$0xff] %vm22, 0.0
    %42 = vst.msk [vmem:[#allocation2 + $0x98] sm:$0xff] %vm22, 0.0
    %43 = vst.msk [vmem:[#allocation2 + $0xa0] sm:$0xff] %vm22, 0.0
    %44 = vst.msk [vmem:[#allocation2 + $0xa8] sm:$0xff] %vm22, 0.0
    %45 = vst.msk [vmem:[#allocation2 + $0xb0] sm:$0xff] %vm22, 0.0
    %46 = vst.msk [vmem:[#allocation2 + $0xb8] sm:$0xff] %vm22, 0.0
    %47 = vst.msk [vmem:[#allocation2 + $0xc0] sm:$0xff] %vm22, 0.0
    %48 = vst.msk [vmem:[#allocation2 + $0xc8] sm:$0xff] %vm22, 0.0
    %49 = vst.msk [vmem:[#allocation2 + $0xd0] sm:$0xff] %vm22, 0.0
    %50 = vst.msk [vmem:[#allocation2 + $0xd8] sm:$0xff] %vm22, 0.0
    %51 = vst.msk [vmem:[#allocation2 + $0xe0] sm:$0xff] %vm22, 0.0
    %52 = vst.msk [vmem:[#allocation2 + $0xe8] sm:$0xff] %vm22, 0.0
    %53 = vst.msk [vmem:[#allocation2 + $0xf0] sm:$0xff] %vm22, 0.0
    %54 = vst.msk [vmem:[#allocation2 + $0xf8] sm:$0xff] %vm22, 0.0
    %55 = vst.msk [vmem:[#allocation2 + $0x100] sm:$0xff] %vm22, 0.0
    %56 = vst.msk [vmem:[#allocation2 + $0x108] sm:$0xff] %vm22, 0.0
    %57 = vst.msk [vmem:[#allocation2 + $0x110] sm:$0xff] %vm22, 0.0
    %58 = vst.msk [vmem:[#allocation2 + $0x118] sm:$0xff] %vm22, 0.0
    %59 = vst.msk [vmem:[#allocation2 + $0x120] sm:$0xff] %vm22, 0.0
    %60 = vst.msk [vmem:[#allocation2 + $0x128] sm:$0xff] %vm22, 0.0
    %61 = vst.msk [vmem:[#allocation2 + $0x130] sm:$0xff] %vm22, 0.0
    %62 = vst.msk [vmem:[#allocation2 + $0x138] sm:$0xff] %vm22, 0.0
    %63 = vst.msk [vmem:[#allocation2 + $0x140] sm:$0xff] %vm22, 0.0
    %64 = vst.msk [vmem:[#allocation2 + $0x148] sm:$0xff] %vm22, 0.0
    %65 = vst.msk [vmem:[#allocation2 + $0x150] sm:$0xff] %vm22, 0.0
    %66 = vst.msk [vmem:[#allocation2 + $0x158] sm:$0xff] %vm22, 0.0
    %67 = vst.msk [vmem:[#allocation2 + $0x160] sm:$0xff] %vm22, 0.0
    %68 = vst.msk [vmem:[#allocation2 + $0x168] sm:$0xff] %vm22, 0.0
    %69 = vst.msk [vmem:[#allocation2 + $0x170] sm:$0xff] %vm22, 0.0
    %70 = vst.msk [vmem:[#allocation2 + $0x178] sm:$0xff] %vm22, 0.0
    %71 = vst.msk [vmem:[#allocation2 + $0x180] sm:$0xff] %vm22, 0.0
    %72 = vst.msk [vmem:[#allocation2 + $0x188] sm:$0xff] %vm22, 0.0
    %73 = vst.msk [vmem:[#allocation2 + $0x190] sm:$0xff] %vm22, 0.0
    %74 = vst.msk [vmem:[#allocation2 + $0x198] sm:$0xff] %vm22, 0.0
    %75 = vst.msk [vmem:[#allocation2 + $0x1a0] sm:$0xff] %vm22, 0.0
    %76 = vst.msk [vmem:[#allocation2 + $0x1a8] sm:$0xff] %vm22, 0.0
    %77 = vst.msk [vmem:[#allocation2 + $0x1b0] sm:$0xff] %vm22, 0.0
    %78 = vst.msk [vmem:[#allocation2 + $0x1b8] sm:$0xff] %vm22, 0.0
    %79 = vst.msk [vmem:[#allocation2 + $0x1c0] sm:$0xff] %vm22, 0.0
    %80 = vst.msk [vmem:[#allocation2 + $0x1c8] sm:$0xff] %vm22, 0.0
    %81 = vst.msk [vmem:[#allocation2 + $0x1d0] sm:$0xff] %vm22, 0.0
    %82 = vst.msk [vmem:[#allocation2 + $0x1d8] sm:$0xff] %vm22, 0.0
    %83 = vst.msk [vmem:[#allocation2 + $0x1e0] sm:$0xff] %vm22, 0.0
    %84 = vst.msk [vmem:[#allocation2 + $0x1e8] sm:$0xff] %vm22, 0.0
    %85 = vst.msk [vmem:[#allocation2 + $0x1f0] sm:$0xff] %vm22, 0.0
    %86 = vst.msk [vmem:[#allocation2 + $0x1f8] sm:$0xff] %vm22, 0.0
  $region21: #{stem_forward.1} parent=0 // pred_fallthru
    _
  %v87 = vld [vmem:[%s0] sm:$0xff]
  %v88 = vld [vmem:[%s0 + $0x8] sm:$0xff]
  %v89 = vld [vmem:[%s0 + $0x10] sm:$0xff]
  %v90 = vld [vmem:[%s0 + $0x18] sm:$0xff]
  %v91 = vld [vmem:[%s0 + $0x20] sm:$0xff]
  %v92 = vld [vmem:[%s0 + $0x28] sm:$0xff]
  %v93 = vld [vmem:[%s0 + $0x30] sm:$0xff]
  %v94 = vld [vmem:[%s0 + $0x38] sm:$0xff]
  %v95 = vld [vmem:[%s0 + $0x40] sm:$0xff]
  %v96 = vld [vmem:[%s0 + $0x48] sm:$0xff]
  %v97 = vld [vmem:[%s0 + $0x50] sm:$0xff]
  %v98 = vld [vmem:[%s0 + $0x58] sm:$0xff]
  %v99 = vld [vmem:[%s0 + $0x60] sm:$0xff]
  %v100 = vld [vmem:[%s0 + $0x68] sm:$0xff]
  %v101 = vld [vmem:[%s0 + $0x70] sm:$0xff]
  %v102 = vld [vmem:[%s0 + $0x78] sm:$0xff]
  %v103 = vld [vmem:[%s0 + $0x80] sm:$0xff]
  %v104 = vld [vmem:[%s0 + $0x88] sm:$0xff]
  %v105 = vld [vmem:[%s0 + $0x90] sm:$0xff]
  %v106 = vld [vmem:[%s0 + $0x98] sm:$0xff]
  %v107 = vld [vmem:[%s0 + $0xa0] sm:$0xff]
  %v108 = vld [vmem:[%s0 + $0xa8] sm:$0xff]
  %v109 = vld [vmem:[%s0 + $0xb0] sm:$0xff]
  %v110 = vld [vmem:[%s0 + $0xb8] sm:$0xff]
  %v111 = vld [vmem:[%s0 + $0xc0] sm:$0xff]
  %v112 = vld [vmem:[%s0 + $0xc8] sm:$0xff]
  %v113 = vld [vmem:[%s0 + $0xd0] sm:$0xff]
  %v114 = vld [vmem:[%s0 + $0xd8] sm:$0xff]
  %v115 = vld [vmem:[%s0 + $0xe0] sm:$0xff]
  %v116 = vld [vmem:[%s0 + $0xe8] sm:$0xff]
  %v117 = vld [vmem:[%s0 + $0xf0] sm:$0xff]
  %v118 = vld [vmem:[%s0 + $0xf8] sm:$0xff]
  %v119 = vld [vmem:[%s0 + $0x100] sm:$0xff]
  %v120 = vld [vmem:[%s0 + $0x108] sm:$0xff]
  %v121 = vld [vmem:[%s0 + $0x110] sm:$0xff]
  %v122 = vld [vmem:[%s0 + $0x118] sm:$0xff]
  %v123 = vld [vmem:[%s0 + $0x120] sm:$0xff]
  %v124 = vld [vmem:[%s0 + $0x128] sm:$0xff]
  %v125 = vld [vmem:[%s0 + $0x130] sm:$0xff]
  %v126 = vld [vmem:[%s0 + $0x138] sm:$0xff]
  %v127 = vld [vmem:[%s0 + $0x140] sm:$0xff]
  %v128 = vld [vmem:[%s0 + $0x148] sm:$0xff]
  %v129 = vld [vmem:[%s0 + $0x150] sm:$0xff]
  %v130 = vld [vmem:[%s0 + $0x158] sm:$0xff]
  %v131 = vld [vmem:[%s0 + $0x160] sm:$0xff]
  %v132 = vld [vmem:[%s0 + $0x168] sm:$0xff]
  %v133 = vld [vmem:[%s0 + $0x170] sm:$0xff]
  %v134 = vld [vmem:[%s0 + $0x178] sm:$0xff]
  %v135 = vld [vmem:[%s0 + $0x180] sm:$0xff]
  %v136 = vld [vmem:[%s0 + $0x188] sm:$0xff]
  %v137 = vld [vmem:[%s0 + $0x190] sm:$0xff]
  %v138 = vld [vmem:[%s0 + $0x198] sm:$0xff]
  %v139 = vld [vmem:[%s0 + $0x1a0] sm:$0xff]
  %v140 = vld [vmem:[%s0 + $0x1a8] sm:$0xff]
  %v141 = vld [vmem:[%s0 + $0x1b0] sm:$0xff]
  %v142 = vld [vmem:[%s0 + $0x1b8] sm:$0xff]
  %v143 = vld [vmem:[%s0 + $0x1c0] sm:$0xff]
  %v144 = vld [vmem:[%s0 + $0x1c8] sm:$0xff]
  %v145 = vld [vmem:[%s0 + $0x1d0] sm:$0xff]
  %v146 = vld [vmem:[%s0 + $0x1d8] sm:$0xff]
  %v147 = vld [vmem:[%s0 + $0x1e0] sm:$0xff]
  %v148 = vld [vmem:[%s0 + $0x1e8] sm:$0xff]
  %v149 = vld [vmem:[%s0 + $0x1f0] sm:$0xff]
  %v150 = vld [vmem:[%s0 + $0x1f8] sm:$0xff]
  %v151 = vld [vmem:[#allocation2] sm:$0xff]
  %v152 = vld [vmem:[#allocation2 + $0x8] sm:$0xff]
  %v153 = vld [vmem:[#allocation2 + $0x10] sm:$0xff]
  %v154 = vld [vmem:[#allocation2 + $0x18] sm:$0xff]
  %v155 = vld [vmem:[#allocation2 + $0x20] sm:$0xff]
  %v156 = vld [vmem:[#allocation2 + $0x28] sm:$0xff]
  %v157 = vld [vmem:[#allocation2 + $0x30] sm:$0xff]
  %v158 = vld [vmem:[#allocation2 + $0x38] sm:$0xff]
  %v159 = vld [vmem:[#allocation2 + $0x40] sm:$0xff]
  %v160 = vld [vmem:[#allocation2 + $0x48] sm:$0xff]
  %v161 = vld [vmem:[#allocation2 + $0x50] sm:$0xff]
  %v162 = vld [vmem:[#allocation2 + $0x58] sm:$0xff]
  %v163 = vld [vmem:[#allocation2 + $0x60] sm:$0xff]
  %v164 = vld [vmem:[#allocation2 + $0x68] sm:$0xff]
  %v165 = vld [vmem:[#allocation2 + $0x70] sm:$0xff]
  %v166 = vld [vmem:[#allocation2 + $0x78] sm:$0xff]
  %v167 = vld [vmem:[#allocation2 + $0x80] sm:$0xff]
  %v168 = vld [vmem:[#allocation2 + $0x88] sm:$0xff]
  %v169 = vld [vmem:[#allocation2 + $0x90] sm:$0xff]
  %v170 = vld [vmem:[#allocation2 + $0x98] sm:$0xff]
  %v171 = vld [vmem:[#allocation2 + $0xa0] sm:$0xff]
  %v172 = vld [vmem:[#allocation2 + $0xa8] sm:$0xff]
  %v173 = vld [vmem:[#allocation2 + $0xb0] sm:$0xff]
  %v174 = vld [vmem:[#allocation2 + $0xb8] sm:$0xff]
  %v175 = vld [vmem:[#allocation2 + $0xc0] sm:$0xff]
  %v176 = vld [vmem:[#allocation2 + $0xc8] sm:$0xff]
  %v177 = vld [vmem:[#allocation2 + $0xd0] sm:$0xff]
  %v178 = vld [vmem:[#allocation2 + $0xd8] sm:$0xff]
  %v179 = vld [vmem:[#allocation2 + $0xe0] sm:$0xff]
  %v180 = vld [vmem:[#allocation2 + $0xe8] sm:$0xff]
  %v181 = vld [vmem:[#allocation2 + $0xf0] sm:$0xff]
  %v182 = vld [vmem:[#allocation2 + $0xf8] sm:$0xff]
  %v183 = vld [vmem:[#allocation2 + $0x100] sm:$0xff]
  %v184 = vld [vmem:[#allocation2 + $0x108] sm:$0xff]
  %v185 = vld [vmem:[#allocation2 + $0x110] sm:$0xff]
  %v186 = vld [vmem:[#allocation2 + $0x118] sm:$0xff]
  %v187 = vld [vmem:[#allocation2 + $0x120] sm:$0xff]
  %v188 = vld [vmem:[#allocation2 + $0x128] sm:$0xff]
  %v189 = vld [vmem:[#allocation2 + $0x130] sm:$0xff]
  %v190 = vld [vmem:[#allocation2 + $0x138] sm:$0xff]
  %v191 = vld [vmem:[#allocation2 + $0x140] sm:$0xff]
  %v192 = vld [vmem:[#allocation2 + $0x148] sm:$0xff]
  %v193 = vld [vmem:[#allocation2 + $0x150] sm:$0xff]
  %v194 = vld [vmem:[#allocation2 + $0x158] sm:$0xff]
  %v195 = vld [vmem:[#allocation2 + $0x160] sm:$0xff]
  %v196 = vld [vmem:[#allocation2 + $0x168] sm:$0xff]
  %v197 = vld [vmem:[#allocation2 + $0x170] sm:$0xff]
  %v198 = vld [vmem:[#allocation2 + $0x178] sm:$0xff]
  %v199 = vld [vmem:[#allocation2 + $0x180] sm:$0xff]
  %v200 = vld [vmem:[#allocation2 + $0x188] sm:$0xff]
  %v201 = vld [vmem:[#allocation2 + $0x190] sm:$0xff]
  %v202 = vld [vmem:[#allocation2 + $0x198] sm:$0xff]
  %v203 = vld [vmem:[#allocation2 + $0x1a0] sm:$0xff]
  %v204 = vld [vmem:[#allocation2 + $0x1a8] sm:$0xff]
  %v205 = vld [vmem:[#allocation2 + $0x1b0] sm:$0xff]
  %v206 = vld [vmem:[#allocation2 + $0x1b8] sm:$0xff]
  %v207 = vld [vmem:[#allocation2 + $0x1c0] sm:$0xff]
  %v208 = vld [vmem:[#allocation2 + $0x1c8] sm:$0xff]
  %v209 = vld [vmem:[#allocation2 + $0x1d0] sm:$0xff]
  %v210 = vld [vmem:[#allocation2 + $0x1d8] sm:$0xff]
  %v211 = vld [vmem:[#allocation2 + $0x1e0] sm:$0xff]
  %v212 = vld [vmem:[#allocation2 + $0x1e8] sm:$0xff]
  %v213 = vld [vmem:[#allocation2 + $0x1f0] sm:$0xff]
  %v214 = vld [vmem:[#allocation2 + $0x1f8] sm:$0xff]
  %v215 = vld [vmem:[%s1] sm:$0xf]
  %v216 = vld [vmem:[%s1 + $0x4] sm:$0xf]
  %v217 = vld [vmem:[%s1 + $0x8] sm:$0xf]
  %v218 = vld [vmem:[%s1 + $0xc] sm:$0xf]
  %v219 = vld [vmem:[%s1 + $0x10] sm:$0xf]
  %v220 = vld [vmem:[%s1 + $0x14] sm:$0xf]
  %v221 = vld [vmem:[%s1 + $0x18] sm:$0xf]
  %v222 = vld [vmem:[%s1 + $0x1c] sm:$0xf]
  %v223 = vld [vmem:[%s1 + $0x20] sm:$0xf]
  %v224 = vld [vmem:[%s1 + $0x24] sm:$0xf]
  %v225 = vld [vmem:[%s1 + $0x28] sm:$0xf]
  %v226 = vld [vmem:[%s1 + $0x2c] sm:$0xf]
  %v227 = vld [vmem:[%s1 + $0x30] sm:$0xf]
  %v228 = vld [vmem:[%s1 + $0x34] sm:$0xf]
  %v229 = vld [vmem:[%s1 + $0x38] sm:$0xf]
  %v230 = vld [vmem:[%s1 + $0x3c] sm:$0xf]
  %v231 = vld [vmem:[%s1 + $0x40] sm:$0xf]
  %v232 = vld [vmem:[%s1 + $0x44] sm:$0xf]
  %v233 = vld [vmem:[%s1 + $0x48] sm:$0x3]
  %v298 = vunpack.c.l.b16 %v87
  %v299 = vunpack.c.h.b16 %v87
  %v300 = vunpack.c.l.b16 %v88
  %v301 = vunpack.c.h.b16 %v88
  %v302 = vunpack.c.l.b16 %v89
  %v303 = vunpack.c.h.b16 %v89
  %v304 = vunpack.c.l.b16 %v90
  %v305 = vunpack.c.h.b16 %v90
  %v306 = vunpack.c.l.b16 %v91
  %v307 = vunpack.c.h.b16 %v91
  %v308 = vunpack.c.l.b16 %v92
  %v309 = vunpack.c.h.b16 %v92
  %v310 = vunpack.c.l.b16 %v93
  %v311 = vunpack.c.h.b16 %v93
  %v312 = vunpack.c.l.b16 %v94
  %v313 = vunpack.c.h.b16 %v94
  %v314 = vunpack.c.l.b16 %v95
  %v315 = vunpack.c.h.b16 %v95
  %v316 = vunpack.c.l.b16 %v96
  %v317 = vunpack.c.h.b16 %v96
  %v318 = vunpack.c.l.b16 %v97
  %v319 = vunpack.c.h.b16 %v97
  %v320 = vunpack.c.l.b16 %v98
  %v321 = vunpack.c.h.b16 %v98
  %v322 = vunpack.c.l.b16 %v99
  %v323 = vunpack.c.h.b16 %v99
  %v324 = vunpack.c.l.b16 %v100
  %v325 = vunpack.c.h.b16 %v100
  %v326 = vunpack.c.l.b16 %v101
  %v327 = vunpack.c.h.b16 %v101
  %v328 = vunpack.c.l.b16 %v102
  %v329 = vunpack.c.h.b16 %v102
  %v330 = vunpack.c.l.b16 %v103
  %v331 = vunpack.c.h.b16 %v103
  %v332 = vunpack.c.l.b16 %v104
  %v333 = vunpack.c.h.b16 %v104
  %v334 = vunpack.c.l.b16 %v105
  %v335 = vunpack.c.h.b16 %v105
  %v336 = vunpack.c.l.b16 %v106
  %v337 = vunpack.c.h.b16 %v106
  %v338 = vunpack.c.l.b16 %v107
  %v339 = vunpack.c.h.b16 %v107
  %v340 = vunpack.c.l.b16 %v108
  %v341 = vunpack.c.h.b16 %v108
  %v342 = vunpack.c.l.b16 %v109
  %v343 = vunpack.c.h.b16 %v109
  %v344 = vunpack.c.l.b16 %v110
  %v345 = vunpack.c.h.b16 %v110
  %v346 = vunpack.c.l.b16 %v111
  %v347 = vunpack.c.h.b16 %v111
  %v348 = vunpack.c.l.b16 %v112
  %v349 = vunpack.c.h.b16 %v112
  %v350 = vunpack.c.l.b16 %v113
  %v351 = vunpack.c.h.b16 %v113
  %v352 = vunpack.c.l.b16 %v114
  %v353 = vunpack.c.h.b16 %v114
  %v354 = vunpack.c.l.b16 %v115
  %v355 = vunpack.c.h.b16 %v115
  %v356 = vunpack.c.l.b16 %v116
  %v357 = vunpack.c.h.b16 %v116
  %v358 = vunpack.c.l.b16 %v117
  %v359 = vunpack.c.h.b16 %v117
  %v360 = vunpack.c.l.b16 %v118
  %v361 = vunpack.c.h.b16 %v118
  %v362 = vunpack.c.l.b16 %v119
  %v363 = vunpack.c.h.b16 %v119
  %v364 = vunpack.c.l.b16 %v120
  %v365 = vunpack.c.h.b16 %v120
  %v366 = vunpack.c.l.b16 %v121
  %v367 = vunpack.c.h.b16 %v121
  %v368 = vunpack.c.l.b16 %v122
  %v369 = vunpack.c.h.b16 %v122
  %v370 = vunpack.c.l.b16 %v123
  %v371 = vunpack.c.h.b16 %v123
  %v372 = vunpack.c.l.b16 %v124
  %v373 = vunpack.c.h.b16 %v124
  %v374 = vunpack.c.l.b16 %v125
  %v375 = vunpack.c.h.b16 %v125
  %v376 = vunpack.c.l.b16 %v126
  %v377 = vunpack.c.h.b16 %v126
  %v378 = vunpack.c.l.b16 %v127
  %v379 = vunpack.c.h.b16 %v127
  %v380 = vunpack.c.l.b16 %v128
  %v381 = vunpack.c.h.b16 %v128
  %v382 = vunpack.c.l.b16 %v129
  %v383 = vunpack.c.h.b16 %v129
  %v384 = vunpack.c.l.b16 %v130
  %v385 = vunpack.c.h.b16 %v130
  %v386 = vunpack.c.l.b16 %v131
  %v387 = vunpack.c.h.b16 %v131
  %v388 = vunpack.c.l.b16 %v132
  %v389 = vunpack.c.h.b16 %v132
  %v390 = vunpack.c.l.b16 %v133
  %v391 = vunpack.c.h.b16 %v133
  %v392 = vunpack.c.l.b16 %v134
  %v393 = vunpack.c.h.b16 %v134
  %v394 = vunpack.c.l.b16 %v135
  %v395 = vunpack.c.h.b16 %v135
  %v396 = vunpack.c.l.b16 %v136
  %v397 = vunpack.c.h.b16 %v136
  %v398 = vunpack.c.l.b16 %v137
  %v399 = vunpack.c.h.b16 %v137
  %v400 = vunpack.c.l.b16 %v138
  %v401 = vunpack.c.h.b16 %v138
  %v402 = vunpack.c.l.b16 %v139
  %v403 = vunpack.c.h.b16 %v139
  %v404 = vunpack.c.l.b16 %v140
  %v405 = vunpack.c.h.b16 %v140
  %v406 = vunpack.c.l.b16 %v141
  %v407 = vunpack.c.h.b16 %v141
  %v408 = vunpack.c.l.b16 %v142
  %v409 = vunpack.c.h.b16 %v142
  %v410 = vunpack.c.l.b16 %v143
  %v411 = vunpack.c.h.b16 %v143
  %v412 = vunpack.c.l.b16 %v144
  %v413 = vunpack.c.h.b16 %v144
  %v414 = vunpack.c.l.b16 %v145
  %v415 = vunpack.c.h.b16 %v145
  %v416 = vunpack.c.l.b16 %v146
  %v417 = vunpack.c.h.b16 %v146
  %v418 = vunpack.c.l.b16 %v147
  %v419 = vunpack.c.h.b16 %v147
  %v420 = vunpack.c.l.b16 %v148
  %v421 = vunpack.c.h.b16 %v148
  %v422 = vunpack.c.l.b16 %v149
  %v423 = vunpack.c.h.b16 %v149
  %v424 = vunpack.c.l.b16 %v150
  %v425 = vunpack.c.h.b16 %v150
  %v426 = vpack.c.b16 %v300, %v298
  %v427 = vpack.c.b16 %v301, %v299
  %v428 = vpack.c.b16 %v304, %v302
  %v429 = vpack.c.b16 %v305, %v303
  %v430 = vpack.c.b16 %v308, %v306
  %v431 = vpack.c.b16 %v309, %v307
  %v432 = vpack.c.b16 %v312, %v310
  %v433 = vpack.c.b16 %v313, %v311
  %v434 = vpack.c.b16 %v316, %v314
  %v435 = vpack.c.b16 %v317, %v315
  %v436 = vpack.c.b16 %v320, %v318
  %v437 = vpack.c.b16 %v321, %v319
  %v438 = vpack.c.b16 %v324, %v322
  %v439 = vpack.c.b16 %v325, %v323
  %v440 = vpack.c.b16 %v328, %v326
  %v441 = vpack.c.b16 %v329, %v327
  %v442 = vpack.c.b16 %v332, %v330
  %v443 = vpack.c.b16 %v333, %v331
  %v444 = vpack.c.b16 %v336, %v334
  %v445 = vpack.c.b16 %v337, %v335
  %v446 = vpack.c.b16 %v340, %v338
  %v447 = vpack.c.b16 %v341, %v339
  %v448 = vpack.c.b16 %v344, %v342
  %v449 = vpack.c.b16 %v345, %v343
  %v450 = vpack.c.b16 %v348, %v346
  %v451 = vpack.c.b16 %v349, %v347
  %v452 = vpack.c.b16 %v352, %v350
  %v453 = vpack.c.b16 %v353, %v351
  %v454 = vpack.c.b16 %v356, %v354
  %v455 = vpack.c.b16 %v357, %v355
  %v456 = vpack.c.b16 %v360, %v358
  %v457 = vpack.c.b16 %v361, %v359
  %v458 = vpack.c.b16 %v364, %v362
  %v459 = vpack.c.b16 %v365, %v363
  %v460 = vpack.c.b16 %v368, %v366
  %v461 = vpack.c.b16 %v369, %v367
  %v462 = vpack.c.b16 %v372, %v370
  %v463 = vpack.c.b16 %v373, %v371
  %v464 = vpack.c.b16 %v376, %v374
  %v465 = vpack.c.b16 %v377, %v375
  %v466 = vpack.c.b16 %v380, %v378
  %v467 = vpack.c.b16 %v381, %v379
  %v468 = vpack.c.b16 %v384, %v382
  %v469 = vpack.c.b16 %v385, %v383
  %v470 = vpack.c.b16 %v388, %v386
  %v471 = vpack.c.b16 %v389, %v387
  %v472 = vpack.c.b16 %v392, %v390
  %v473 = vpack.c.b16 %v393, %v391
  %v474 = vpack.c.b16 %v396, %v394
  %v475 = vpack.c.b16 %v397, %v395
  %v476 = vpack.c.b16 %v400, %v398
  %v477 = vpack.c.b16 %v401, %v399
  %v478 = vpack.c.b16 %v404, %v402
  %v479 = vpack.c.b16 %v405, %v403
  %v480 = vpack.c.b16 %v408, %v406
  %v481 = vpack.c.b16 %v409, %v407
  %v482 = vpack.c.b16 %v412, %v410
  %v483 = vpack.c.b16 %v413, %v411
  %v484 = vpack.c.b16 %v416, %v414
  %v485 = vpack.c.b16 %v417, %v415
  %v486 = vpack.c.b16 %v420, %v418
  %v487 = vpack.c.b16 %v421, %v419
  %v488 = vpack.c.b16 %v424, %v422
  %v489 = vpack.c.b16 %v425, %v423
  %v541 = vunpack.c.l.b16 %v215
  %v542 = vunpack.c.l.b16 %v216
  %v543 = vunpack.c.l.b16 %v217
  %v544 = vunpack.c.l.b16 %v218
  %v545 = vunpack.c.l.b16 %v219
  %v546 = vunpack.c.l.b16 %v220
  %v547 = vunpack.c.l.b16 %v221
  %v548 = vunpack.c.l.b16 %v222
  %v549 = vunpack.c.l.b16 %v223
  %v550 = vunpack.c.l.b16 %v224
  %v551 = vunpack.c.l.b16 %v225
  %v552 = vunpack.c.l.b16 %v226
  %v553 = vunpack.c.l.b16 %v227
  %v554 = vunpack.c.l.b16 %v228
  %v555 = vunpack.c.l.b16 %v229
  %v556 = vunpack.c.l.b16 %v230
  %v557 = vunpack.c.l.b16 %v231
  %v558 = vunpack.c.l.b16 %v232
  %v559 = vunpack.c.l.b16 %v233
  %v560 = vpack.c.b16 %v542, %v541
  %v561 = vpack.c.b16 %v544, %v543
  %v562 = vpack.c.b16 %v546, %v545
  %v563 = vpack.c.b16 %v548, %v547
  %v564 = vpack.c.b16 %v550, %v549
  %v565 = vpack.c.b16 %v552, %v551
  %v566 = vpack.c.b16 %v554, %v553
  %v567 = vpack.c.b16 %v556, %v555
  %v568 = vpack.c.b16 %v558, %v557
  %v569 = vpack.c.b16 %v559, %v559
  %vm579 = vcmask 154624
  %v581 = vsel %vm579, %v427, 0
  %v584 = vsel %vm579, %v429, 0
  %v587 = vsel %vm579, %v431, 0
  %v590 = vsel %vm579, %v433, 0
  %v593 = vsel %vm579, %v435, 0
  %v596 = vsel %vm579, %v437, 0
  %v599 = vsel %vm579, %v439, 0
  %v602 = vsel %vm579, %v441, 0
  %v605 = vsel %vm579, %v443, 0
  %v608 = vsel %vm579, %v445, 0
  %v611 = vsel %vm579, %v447, 0
  %v614 = vsel %vm579, %v449, 0
  %v617 = vsel %vm579, %v451, 0
  %v620 = vsel %vm579, %v453, 0
  %v623 = vsel %vm579, %v455, 0
  %v626 = vsel %vm579, %v457, 0
  %v629 = vsel %vm579, %v459, 0
  %v632 = vsel %vm579, %v461, 0
  %v635 = vsel %vm579, %v463, 0
  %v638 = vsel %vm579, %v465, 0
  %v641 = vsel %vm579, %v467, 0
  %v644 = vsel %vm579, %v469, 0
  %v647 = vsel %vm579, %v471, 0
  %v650 = vsel %vm579, %v473, 0
  %v653 = vsel %vm579, %v475, 0
  %v656 = vsel %vm579, %v477, 0
  %v659 = vsel %vm579, %v479, 0
  %v662 = vsel %vm579, %v481, 0
  %v665 = vsel %vm579, %v483, 0
  %v668 = vsel %vm579, %v485, 0
  %v671 = vsel %vm579, %v487, 0
  %v674 = vsel %vm579, %v489, 0
  %vm676 = vcmask 1040384
  %vm677 = vcmask 1041408
  %v678 = vsel %vm676, 4294967295, 65535
  %v679 = vsel %vm677, %v678, 0
  %v681 = vand.u32 %v569, %v679
  %683 = vmatprep.subr.bf16.mxu0 0
  %684 = vmatpush1.bf16.msra.mxu0 %v560
  %685 = vmatprep.subr.bf16.mxu0 0
  %686 = vmatpush1.bf16.msra.mxu0 %v561
  %687 = vmatprep.subr.bf16.mxu0 0
  %688 = vmatpush1.bf16.msra.mxu0 %v562
  %689 = vmatprep.subr.bf16.mxu0 0
  %690 = vmatpush1.bf16.msra.mxu0 %v563
  %691 = vmatprep.subr.bf16.mxu0 0
  %692 = vmatpush1.bf16.msra.mxu0 %v564
  %693 = vmatprep.subr.bf16.mxu0 0
  %694 = vmatpush1.bf16.msra.mxu0 %v565
  %695 = vmatprep.subr.bf16.mxu0 0
  %696 = vmatpush1.bf16.msra.mxu0 %v566
  %697 = vmatprep.subr.bf16.mxu0 0
  %698 = vmatpush1.bf16.msra.mxu0 %v567
  %699 = vmatprep.subr.bf16.mxu0 0
  %700 = vmatpush1.bf16.msra.mxu0 %v568
  %701 = vmatprep.subr.bf16.mxu0 0
  %702 = vmatpush1.bf16.msra.mxu0 %v681
  %703 = vmatprep.subr.bf16.mxu0 0
  %704 = vmatpush1.bf16.msra.mxu0 0
  %705 = vmatprep.subr.bf16.mxu0 0
  %706 = vmatpush1.bf16.msra.mxu0 0
  %707 = vmatprep.subr.bf16.mxu0 0
  %708 = vmatpush1.bf16.msra.mxu0 0
  %709 = vmatprep.subr.bf16.mxu0 0
  %710 = vmatpush1.bf16.msra.mxu0 0
  %711 = vmatprep.subr.bf16.mxu0 0
  %712 = vmatpush1.bf16.msra.mxu0 0
  %713 = vmatprep.subr.bf16.mxu0 0
  %714 = vmatpush1.bf16.msra.mxu0 0
  %715 = vmatprep.mubr.bf16.mxu0 %v581
  %716 = vmatmul.mubr.bf16.gmra.mrb[0].mxu0 %v426
  %v717 = vpop.f32.mrb[0].mxu0
  %v718 = vadd.f32 0.0, %v717
  %v719 = vpop.f32.mrb[0].mxu0
  %v720 = vpop.f32.mrb[0].mxu0
  %v721 = vadd.f32 0.0, %v720
  %v722 = vpop.f32.mrb[0].mxu0
  %723 = vmatprep.mubr.bf16.mxu0 %v584
  %724 = vmatmul.mubr.bf16.gmra.mrb[0].mxu0 %v428
  %v725 = vpop.f32.mrb[0].mxu0
  %v726 = vadd.f32 0.0, %v725
  %v727 = vpop.f32.mrb[0].mxu0
  %v728 = vpop.f32.mrb[0].mxu0
  %v729 = vadd.f32 0.0, %v728
  %v730 = vpop.f32.mrb[0].mxu0
  %731 = vmatprep.mubr.bf16.mxu0 %v587
  %732 = vmatmul.mubr.bf16.gmra.mrb[0].mxu0 %v430
  %v733 = vpop.f32.mrb[0].mxu0
  %v734 = vadd.f32 0.0, %v733
  %v735 = vpop.f32.mrb[0].mxu0
  %v736 = vpop.f32.mrb[0].mxu0
  %v737 = vadd.f32 0.0, %v736
  %v738 = vpop.f32.mrb[0].mxu0
  %739 = vmatprep.mubr.bf16.mxu0 %v590
  %740 = vmatmul.mubr.bf16.gmra.mrb[0].mxu0 %v432
  %v741 = vpop.f32.mrb[0].mxu0
  %v742 = vadd.f32 0.0, %v741
  %v743 = vpop.f32.mrb[0].mxu0
  %v744 = vpop.f32.mrb[0].mxu0
  %v745 = vadd.f32 0.0, %v744
  %v746 = vpop.f32.mrb[0].mxu0
  %747 = vmatprep.mubr.bf16.mxu0 %v593
  %748 = vmatmul.mubr.bf16.gmra.mrb[0].mxu0 %v434
  %v749 = vpop.f32.mrb[0].mxu0
  %v750 = vadd.f32 0.0, %v749
  %v751 = vpop.f32.mrb[0].mxu0
  %v752 = vpop.f32.mrb[0].mxu0
  %v753 = vadd.f32 0.0, %v752
  %v754 = vpop.f32.mrb[0].mxu0
  %755 = vmatprep.mubr.bf16.mxu0 %v596
  %756 = vmatmul.mubr.bf16.gmra.mrb[0].mxu0 %v436
  %v757 = vpop.f32.mrb[0].mxu0
  %v758 = vadd.f32 0.0, %v757
  %v759 = vpop.f32.mrb[0].mxu0
  %v760 = vpop.f32.mrb[0].mxu0
  %v761 = vadd.f32 0.0, %v760
  %v762 = vpop.f32.mrb[0].mxu0
  %763 = vmatprep.mubr.bf16.mxu0 %v599
  %764 = vmatmul.mubr.bf16.gmra.mrb[0].mxu0 %v438
  %v765 = vpop.f32.mrb[0].mxu0
  %v766 = vadd.f32 0.0, %v765
  %v767 = vpop.f32.mrb[0].mxu0
  %v768 = vpop.f32.mrb[0].mxu0
  %v769 = vadd.f32 0.0, %v768
  %v770 = vpop.f32.mrb[0].mxu0
  %771 = vmatprep.mubr.bf16.mxu0 %v602
  %772 = vmatmul.mubr.bf16.gmra.mrb[0].mxu0 %v440
  %v773 = vpop.f32.mrb[0].mxu0
  %v774 = vadd.f32 0.0, %v773
  %v775 = vpop.f32.mrb[0].mxu0
  %v776 = vpop.f32.mrb[0].mxu0
  %v777 = vadd.f32 0.0, %v776
  %v778 = vpop.f32.mrb[0].mxu0
  %779 = vmatprep.mubr.bf16.mxu0 %v605
  %780 = vmatmul.mubr.bf16.gmra.mrb[0].mxu0 %v442
  %v781 = vpop.f32.mrb[0].mxu0
  %v782 = vadd.f32 0.0, %v781
  %v783 = vpop.f32.mrb[0].mxu0
  %v784 = vpop.f32.mrb[0].mxu0
  %v785 = vadd.f32 0.0, %v784
  %v786 = vpop.f32.mrb[0].mxu0
  %787 = vmatprep.mubr.bf16.mxu0 %v608
  %788 = vmatmul.mubr.bf16.gmra.mrb[0].mxu0 %v444
  %v789 = vpop.f32.mrb[0].mxu0
  %v790 = vadd.f32 0.0, %v789
  %v791 = vpop.f32.mrb[0].mxu0
  %v792 = vpop.f32.mrb[0].mxu0
  %v793 = vadd.f32 0.0, %v792
  %v794 = vpop.f32.mrb[0].mxu0
  %795 = vmatprep.mubr.bf16.mxu0 %v611
  %796 = vmatmul.mubr.bf16.gmra.mrb[0].mxu0 %v446
  %v797 = vpop.f32.mrb[0].mxu0
  %v798 = vadd.f32 0.0, %v797
  %v799 = vpop.f32.mrb[0].mxu0
  %v800 = vpop.f32.mrb[0].mxu0
  %v801 = vadd.f32 0.0, %v800
  %v802 = vpop.f32.mrb[0].mxu0
  %803 = vmatprep.mubr.bf16.mxu0 %v614
  %804 = vmatmul.mubr.bf16.gmra.mrb[0].mxu0 %v448
  %v805 = vpop.f32.mrb[0].mxu0
  %v806 = vadd.f32 0.0, %v805
  %v807 = vpop.f32.mrb[0].mxu0
  %v808 = vpop.f32.mrb[0].mxu0
  %v809 = vadd.f32 0.0, %v808
  %v810 = vpop.f32.mrb[0].mxu0
  %811 = vmatprep.mubr.bf16.mxu0 %v617
  %812 = vmatmul.mubr.bf16.gmra.mrb[0].mxu0 %v450
  %v813 = vpop.f32.mrb[0].mxu0
  %v814 = vadd.f32 0.0, %v813
  %v815 = vpop.f32.mrb[0].mxu0
  %v816 = vpop.f32.mrb[0].mxu0
  %v817 = vadd.f32 0.0, %v816
  %v818 = vpop.f32.mrb[0].mxu0
  %819 = vmatprep.mubr.bf16.mxu0 %v620
  %820 = vmatmul.mubr.bf16.gmra.mrb[0].mxu0 %v452
  %v821 = vpop.f32.mrb[0].mxu0
  %v822 = vadd.f32 0.0, %v821
  %v823 = vpop.f32.mrb[0].mxu0
  %v824 = vpop.f32.mrb[0].mxu0
  %v825 = vadd.f32 0.0, %v824
  %v826 = vpop.f32.mrb[0].mxu0
  %827 = vmatprep.mubr.bf16.mxu0 %v623
  %828 = vmatmul.mubr.bf16.gmra.mrb[0].mxu0 %v454
  %v829 = vpop.f32.mrb[0].mxu0
  %v830 = vadd.f32 0.0, %v829
  %v831 = vpop.f32.mrb[0].mxu0
  %v832 = vpop.f32.mrb[0].mxu0
  %v833 = vadd.f32 0.0, %v832
  %v834 = vpop.f32.mrb[0].mxu0
  %835 = vmatprep.mubr.bf16.mxu0 %v626
  %836 = vmatmul.mubr.bf16.gmra.mrb[0].mxu0 %v456
  %v837 = vpop.f32.mrb[0].mxu0
  %v838 = vadd.f32 0.0, %v837
  %v839 = vpop.f32.mrb[0].mxu0
  %v840 = vpop.f32.mrb[0].mxu0
  %v841 = vadd.f32 0.0, %v840
  %v842 = vpop.f32.mrb[0].mxu0
  %843 = vmatprep.mubr.bf16.mxu0 %v629
  %844 = vmatmul.mubr.bf16.gmra.mrb[0].mxu0 %v458
  %v845 = vpop.f32.mrb[0].mxu0
  %v846 = vadd.f32 0.0, %v845
  %v847 = vpop.f32.mrb[0].mxu0
  %v848 = vpop.f32.mrb[0].mxu0
  %v849 = vadd.f32 0.0, %v848
  %v850 = vpop.f32.mrb[0].mxu0
  %851 = vmatprep.mubr.bf16.mxu0 %v632
  %852 = vmatmul.mubr.bf16.gmra.mrb[0].mxu0 %v460
  %v853 = vpop.f32.mrb[0].mxu0
  %v854 = vadd.f32 0.0, %v853
  %v855 = vpop.f32.mrb[0].mxu0
  %v856 = vpop.f32.mrb[0].mxu0
  %v857 = vadd.f32 0.0, %v856
  %v858 = vpop.f32.mrb[0].mxu0
  %859 = vmatprep.mubr.bf16.mxu0 %v635
  %860 = vmatmul.mubr.bf16.gmra.mrb[0].mxu0 %v462
  %v861 = vpop.f32.mrb[0].mxu0
  %v862 = vadd.f32 0.0, %v861
  %v863 = vpop.f32.mrb[0].mxu0
  %v864 = vpop.f32.mrb[0].mxu0
  %v865 = vadd.f32 0.0, %v864
  %v866 = vpop.f32.mrb[0].mxu0
  %867 = vmatprep.mubr.bf16.mxu0 %v638
  %868 = vmatmul.mubr.bf16.gmra.mrb[0].mxu0 %v464
  %v869 = vpop.f32.mrb[0].mxu0
  %v870 = vadd.f32 0.0, %v869
  %v871 = vpop.f32.mrb[0].mxu0
  %v872 = vpop.f32.mrb[0].mxu0
  %v873 = vadd.f32 0.0, %v872
  %v874 = vpop.f32.mrb[0].mxu0
  %875 = vmatprep.mubr.bf16.mxu0 %v641
  %876 = vmatmul.mubr.bf16.gmra.mrb[0].mxu0 %v466
  %v877 = vpop.f32.mrb[0].mxu0
  %v878 = vadd.f32 0.0, %v877
  %v879 = vpop.f32.mrb[0].mxu0
  %v880 = vpop.f32.mrb[0].mxu0
  %v881 = vadd.f32 0.0, %v880
  %v882 = vpop.f32.mrb[0].mxu0
  %883 = vmatprep.mubr.bf16.mxu0 %v644
  %884 = vmatmul.mubr.bf16.gmra.mrb[0].mxu0 %v468
  %v885 = vpop.f32.mrb[0].mxu0
  %v886 = vadd.f32 0.0, %v885
  %v887 = vpop.f32.mrb[0].mxu0
  %v888 = vpop.f32.mrb[0].mxu0
  %v889 = vadd.f32 0.0, %v888
  %v890 = vpop.f32.mrb[0].mxu0
  %891 = vmatprep.mubr.bf16.mxu0 %v647
  %892 = vmatmul.mubr.bf16.gmra.mrb[0].mxu0 %v470
  %v893 = vpop.f32.mrb[0].mxu0
  %v894 = vadd.f32 0.0, %v893
  %v895 = vpop.f32.mrb[0].mxu0
  %v896 = vpop.f32.mrb[0].mxu0
  %v897 = vadd.f32 0.0, %v896
  %v898 = vpop.f32.mrb[0].mxu0
  %899 = vmatprep.mubr.bf16.mxu0 %v650
  %900 = vmatmul.mubr.bf16.gmra.mrb[0].mxu0 %v472
  %v901 = vpop.f32.mrb[0].mxu0
  %v902 = vadd.f32 0.0, %v901
  %v903 = vpop.f32.mrb[0].mxu0
  %v904 = vpop.f32.mrb[0].mxu0
  %v905 = vadd.f32 0.0, %v904
  %v906 = vpop.f32.mrb[0].mxu0
  %907 = vmatprep.mubr.bf16.mxu0 %v653
  %908 = vmatmul.mubr.bf16.gmra.mrb[0].mxu0 %v474
  %v909 = vpop.f32.mrb[0].mxu0
  %v910 = vadd.f32 0.0, %v909
  %v911 = vpop.f32.mrb[0].mxu0
  %v912 = vpop.f32.mrb[0].mxu0
  %v913 = vadd.f32 0.0, %v912
  %v914 = vpop.f32.mrb[0].mxu0
  %915 = vmatprep.mubr.bf16.mxu0 %v656
  %916 = vmatmul.mubr.bf16.gmra.mrb[0].mxu0 %v476
  %v917 = vpop.f32.mrb[0].mxu0
  %v918 = vadd.f32 0.0, %v917
  %v919 = vpop.f32.mrb[0].mxu0
  %v920 = vpop.f32.mrb[0].mxu0
  %v921 = vadd.f32 0.0, %v920
  %v922 = vpop.f32.mrb[0].mxu0
  %923 = vmatprep.mubr.bf16.mxu0 %v659
  %924 = vmatmul.mubr.bf16.gmra.mrb[0].mxu0 %v478
  %v925 = vpop.f32.mrb[0].mxu0
  %v926 = vadd.f32 0.0, %v925
  %v927 = vpop.f32.mrb[0].mxu0
  %v928 = vpop.f32.mrb[0].mxu0
  %v929 = vadd.f32 0.0, %v928
  %v930 = vpop.f32.mrb[0].mxu0
  %931 = vmatprep.mubr.bf16.mxu0 %v662
  %932 = vmatmul.mubr.bf16.gmra.mrb[0].mxu0 %v480
  %v933 = vpop.f32.mrb[0].mxu0
  %v934 = vadd.f32 0.0, %v933
  %v935 = vpop.f32.mrb[0].mxu0
  %v936 = vpop.f32.mrb[0].mxu0
  %v937 = vadd.f32 0.0, %v936
  %v938 = vpop.f32.mrb[0].mxu0
  %939 = vmatprep.mubr.bf16.mxu0 %v665
  %940 = vmatmul.mubr.bf16.gmra.mrb[0].mxu0 %v482
  %v941 = vpop.f32.mrb[0].mxu0
  %v942 = vadd.f32 0.0, %v941
  %v943 = vpop.f32.mrb[0].mxu0
  %v944 = vpop.f32.mrb[0].mxu0
  %v945 = vadd.f32 0.0, %v944
  %v946 = vpop.f32.mrb[0].mxu0
  %947 = vmatprep.mubr.bf16.mxu0 %v668
  %948 = vmatmul.mubr.bf16.gmra.mrb[0].mxu0 %v484
  %v949 = vpop.f32.mrb[0].mxu0
  %v950 = vadd.f32 0.0, %v949
  %v951 = vpop.f32.mrb[0].mxu0
  %v952 = vpop.f32.mrb[0].mxu0
  %v953 = vadd.f32 0.0, %v952
  %v954 = vpop.f32.mrb[0].mxu0
  %955 = vmatprep.mubr.bf16.mxu0 %v671
  %956 = vmatmul.mubr.bf16.gmra.mrb[0].mxu0 %v486
  %v957 = vpop.f32.mrb[0].mxu0
  %v958 = vadd.f32 0.0, %v957
  %v959 = vpop.f32.mrb[0].mxu0
  %v960 = vpop.f32.mrb[0].mxu0
  %v961 = vadd.f32 0.0, %v960
  %v962 = vpop.f32.mrb[0].mxu0
  %963 = vmatprep.mubr.bf16.mxu0 %v674
  %964 = vmatmul.mubr.bf16.gmra.mrb[0].mxu0 %v488
  %v965 = vpop.f32.mrb[0].mxu0
  %v966 = vadd.f32 0.0, %v965
  %v967 = vpop.f32.mrb[0].mxu0
  %v968 = vpop.f32.mrb[0].mxu0
  %v969 = vadd.f32 0.0, %v968
  %v970 = vpop.f32.mrb[0].mxu0
  %971 = vdwg.mxu0
  %v972 = vadd.f32 %v151, %v718
  %v973 = vadd.f32 %v152, %v721
  %v974 = vadd.f32 %v153, %v726
  %v975 = vadd.f32 %v154, %v729
  %v976 = vadd.f32 %v155, %v734
  %v977 = vadd.f32 %v156, %v737
  %v978 = vadd.f32 %v157, %v742
  %v979 = vadd.f32 %v158, %v745
  %v980 = vadd.f32 %v159, %v750
  %v981 = vadd.f32 %v160, %v753
  %v982 = vadd.f32 %v161, %v758
  %v983 = vadd.f32 %v162, %v761
  %v984 = vadd.f32 %v163, %v766
  %v985 = vadd.f32 %v164, %v769
  %v986 = vadd.f32 %v165, %v774
  %v987 = vadd.f32 %v166, %v777
  %v988 = vadd.f32 %v167, %v782
  %v989 = vadd.f32 %v168, %v785
  %v990 = vadd.f32 %v169, %v790
  %v991 = vadd.f32 %v170, %v793
  %v992 = vadd.f32 %v171, %v798
  %v993 = vadd.f32 %v172, %v801
  %v994 = vadd.f32 %v173, %v806
  %v995 = vadd.f32 %v174, %v809
  %v996 = vadd.f32 %v175, %v814
  %v997 = vadd.f32 %v176, %v817
  %v998 = vadd.f32 %v177, %v822
  %v999 = vadd.f32 %v178, %v825
  %v1000 = vadd.f32 %v179, %v830
  %v1001 = vadd.f32 %v180, %v833
  %v1002 = vadd.f32 %v181, %v838
  %v1003 = vadd.f32 %v182, %v841
  %v1004 = vadd.f32 %v183, %v846
  %v1005 = vadd.f32 %v184, %v849
  %v1006 = vadd.f32 %v185, %v854
  %v1007 = vadd.f32 %v186, %v857
  %v1008 = vadd.f32 %v187, %v862
  %v1009 = vadd.f32 %v188, %v865
  %v1010 = vadd.f32 %v189, %v870
  %v1011 = vadd.f32 %v190, %v873
  %v1012 = vadd.f32 %v191, %v878
  %v1013 = vadd.f32 %v192, %v881
  %v1014 = vadd.f32 %v193, %v886
  %v1015 = vadd.f32 %v194, %v889
  %v1016 = vadd.f32 %v195, %v894
  %v1017 = vadd.f32 %v196, %v897
  %v1018 = vadd.f32 %v197, %v902
  %v1019 = vadd.f32 %v198, %v905
  %v1020 = vadd.f32 %v199, %v910
  %v1021 = vadd.f32 %v200, %v913
  %v1022 = vadd.f32 %v201, %v918
  %v1023 = vadd.f32 %v202, %v921
  %v1024 = vadd.f32 %v203, %v926
  %v1025 = vadd.f32 %v204, %v929
  %v1026 = vadd.f32 %v205, %v934
  %v1027 = vadd.f32 %v206, %v937
  %v1028 = vadd.f32 %v207, %v942
  %v1029 = vadd.f32 %v208, %v945
  %v1030 = vadd.f32 %v209, %v950
  %v1031 = vadd.f32 %v210, %v953
  %v1032 = vadd.f32 %v211, %v958
  %v1033 = vadd.f32 %v212, %v961
  %v1034 = vadd.f32 %v213, %v966
  %v1035 = vadd.f32 %v214, %v969
  %vm1036 = vcmask 523264
  %1037 = vst.msk [vmem:[#allocation2] sm:$0xff] %vm1036, %v972
  %1038 = vst.msk [vmem:[#allocation2 + $0x8] sm:$0xff] %vm1036, %v973
  %1039 = vst.msk [vmem:[#allocation2 + $0x10] sm:$0xff] %vm1036, %v974
  %1040 = vst.msk [vmem:[#allocation2 + $0x18] sm:$0xff] %vm1036, %v975
  %1041 = vst.msk [vmem:[#allocation2 + $0x20] sm:$0xff] %vm1036, %v976
  %1042 = vst.msk [vmem:[#allocation2 + $0x28] sm:$0xff] %vm1036, %v977
  %1043 = vst.msk [vmem:[#allocation2 + $0x30] sm:$0xff] %vm1036, %v978
  %1044 = vst.msk [vmem:[#allocation2 + $0x38] sm:$0xff] %vm1036, %v979
  %1045 = vst.msk [vmem:[#allocation2 + $0x40] sm:$0xff] %vm1036, %v980
  %1046 = vst.msk [vmem:[#allocation2 + $0x48] sm:$0xff] %vm1036, %v981
  %1047 = vst.msk [vmem:[#allocation2 + $0x50] sm:$0xff] %vm1036, %v982
  %1048 = vst.msk [vmem:[#allocation2 + $0x58] sm:$0xff] %vm1036, %v983
  %1049 = vst.msk [vmem:[#allocation2 + $0x60] sm:$0xff] %vm1036, %v984
  %1050 = vst.msk [vmem:[#allocation2 + $0x68] sm:$0xff] %vm1036, %v985
  %1051 = vst.msk [vmem:[#allocation2 + $0x70] sm:$0xff] %vm1036, %v986
  %1052 = vst.msk [vmem:[#allocation2 + $0x78] sm:$0xff] %vm1036, %v987
  %1053 = vst.msk [vmem:[#allocation2 + $0x80] sm:$0xff] %vm1036, %v988
  %1054 = vst.msk [vmem:[#allocation2 + $0x88] sm:$0xff] %vm1036, %v989
  %1055 = vst.msk [vmem:[#allocation2 + $0x90] sm:$0xff] %vm1036, %v990
  %1056 = vst.msk [vmem:[#allocation2 + $0x98] sm:$0xff] %vm1036, %v991
  %1057 = vst.msk [vmem:[#allocation2 + $0xa0] sm:$0xff] %vm1036, %v992
  %1058 = vst.msk [vmem:[#allocation2 + $0xa8] sm:$0xff] %vm1036, %v993
  %1059 = vst.msk [vmem:[#allocation2 + $0xb0] sm:$0xff] %vm1036, %v994
  %1060 = vst.msk [vmem:[#allocation2 + $0xb8] sm:$0xff] %vm1036, %v995
  %1061 = vst.msk [vmem:[#allocation2 + $0xc0] sm:$0xff] %vm1036, %v996
  %1062 = vst.msk [vmem:[#allocation2 + $0xc8] sm:$0xff] %vm1036, %v997
  %1063 = vst.msk [vmem:[#allocation2 + $0xd0] sm:$0xff] %vm1036, %v998
  %1064 = vst.msk [vmem:[#allocation2 + $0xd8] sm:$0xff] %vm1036, %v999
  %1065 = vst.msk [vmem:[#allocation2 + $0xe0] sm:$0xff] %vm1036, %v1000
  %1066 = vst.msk [vmem:[#allocation2 + $0xe8] sm:$0xff] %vm1036, %v1001
  %1067 = vst.msk [vmem:[#allocation2 + $0xf0] sm:$0xff] %vm1036, %v1002
  %1068 = vst.msk [vmem:[#allocation2 + $0xf8] sm:$0xff] %vm1036, %v1003
  %1069 = vst.msk [vmem:[#allocation2 + $0x100] sm:$0xff] %vm1036, %v1004
  %1070 = vst.msk [vmem:[#allocation2 + $0x108] sm:$0xff] %vm1036, %v1005
  %1071 = vst.msk [vmem:[#allocation2 + $0x110] sm:$0xff] %vm1036, %v1006
  %1072 = vst.msk [vmem:[#allocation2 + $0x118] sm:$0xff] %vm1036, %v1007
  %1073 = vst.msk [vmem:[#allocation2 + $0x120] sm:$0xff] %vm1036, %v1008
  %1074 = vst.msk [vmem:[#allocation2 + $0x128] sm:$0xff] %vm1036, %v1009
  %1075 = vst.msk [vmem:[#allocation2 + $0x130] sm:$0xff] %vm1036, %v1010
  %1076 = vst.msk [vmem:[#allocation2 + $0x138] sm:$0xff] %vm1036, %v1011
  %1077 = vst.msk [vmem:[#allocation2 + $0x140] sm:$0xff] %vm1036, %v1012
  %1078 = vst.msk [vmem:[#allocation2 + $0x148] sm:$0xff] %vm1036, %v1013
  %1079 = vst.msk [vmem:[#allocation2 + $0x150] sm:$0xff] %vm1036, %v1014
  %1080 = vst.msk [vmem:[#allocation2 + $0x158] sm:$0xff] %vm1036, %v1015
  %1081 = vst.msk [vmem:[#allocation2 + $0x160] sm:$0xff] %vm1036, %v1016
  %1082 = vst.msk [vmem:[#allocation2 + $0x168] sm:$0xff] %vm1036, %v1017
  %1083 = vst.msk [vmem:[#allocation2 + $0x170] sm:$0xff] %vm1036, %v1018
  %1084 = vst.msk [vmem:[#allocation2 + $0x178] sm:$0xff] %vm1036, %v1019
  %1085 = vst.msk [vmem:[#allocation2 + $0x180] sm:$0xff] %vm1036, %v1020
  %1086 = vst.msk [vmem:[#allocation2 + $0x188] sm:$0xff] %vm1036, %v1021
  %1087 = vst.msk [vmem:[#allocation2 + $0x190] sm:$0xff] %vm1036, %v1022
  %1088 = vst.msk [vmem:[#allocation2 + $0x198] sm:$0xff] %vm1036, %v1023
  %1089 = vst.msk [vmem:[#allocation2 + $0x1a0] sm:$0xff] %vm1036, %v1024
  %1090 = vst.msk [vmem:[#allocation2 + $0x1a8] sm:$0xff] %vm1036, %v1025
  %1091 = vst.msk [vmem:[#allocation2 + $0x1b0] sm:$0xff] %vm1036, %v1026
  %1092 = vst.msk [vmem:[#allocation2 + $0x1b8] sm:$0xff] %vm1036, %v1027
  %1093 = vst.msk [vmem:[#allocation2 + $0x1c0] sm:$0xff] %vm1036, %v1028
  %1094 = vst.msk [vmem:[#allocation2 + $0x1c8] sm:$0xff] %vm1036, %v1029
  %1095 = vst.msk [vmem:[#allocation2 + $0x1d0] sm:$0xff] %vm1036, %v1030
  %1096 = vst.msk [vmem:[#allocation2 + $0x1d8] sm:$0xff] %vm1036, %v1031
  %1097 = vst.msk [vmem:[#allocation2 + $0x1e0] sm:$0xff] %vm1036, %v1032
  %1098 = vst.msk [vmem:[#allocation2 + $0x1e8] sm:$0xff] %vm1036, %v1033
  %1099 = vst.msk [vmem:[#allocation2 + $0x1f0] sm:$0xff] %vm1036, %v1034
  %1100 = vst.msk [vmem:[#allocation2 + $0x1f8] sm:$0xff] %vm1036, %v1035
  // Predicated region
  $region22: #{stem_forward.1} parent=0 // pred_check
    %p1101 = pneg %p18
  $region23: #{stem_forward.1} parent=0 // pred_check_branch
    %1103 = sbr.rel (%p1101) target = $region25
  $region24: #{stem_forward.1} parent=0 // pred_region
    %v1104 = vld [vmem:[#allocation2] sm:$0xff]
    %v1105 = vld [vmem:[#allocation2 + $0x8] sm:$0xff]
    %v1106 = vld [vmem:[#allocation2 + $0x10] sm:$0xff]
    %v1107 = vld [vmem:[#allocation2 + $0x18] sm:$0xff]
    %v1108 = vld [vmem:[#allocation2 + $0x20] sm:$0xff]
    %v1109 = vld [vmem:[#allocation2 + $0x28] sm:$0xff]
    %v1110 = vld [vmem:[#allocation2 + $0x30] sm:$0xff]
    %v1111 = vld [vmem:[#allocation2 + $0x38] sm:$0xff]
    %v1112 = vld [vmem:[#allocation2 + $0x40] sm:$0xff]
    %v1113 = vld [vmem:[#allocation2 + $0x48] sm:$0xff]
    %v1114 = vld [vmem:[#allocation2 + $0x50] sm:$0xff]
    %v1115 = vld [vmem:[#allocation2 + $0x58] sm:$0xff]
    %v1116 = vld [vmem:[#allocation2 + $0x60] sm:$0xff]
    %v1117 = vld [vmem:[#allocation2 + $0x68] sm:$0xff]
    %v1118 = vld [vmem:[#allocation2 + $0x70] sm:$0xff]
    %v1119 = vld [vmem:[#allocation2 + $0x78] sm:$0xff]
    %v1120 = vld [vmem:[#allocation2 + $0x80] sm:$0xff]
    %v1121 = vld [vmem:[#allocation2 + $0x88] sm:$0xff]
    %v1122 = vld [vmem:[#allocation2 + $0x90] sm:$0xff]
    %v1123 = vld [vmem:[#allocation2 + $0x98] sm:$0xff]
    %v1124 = vld [vmem:[#allocation2 + $0xa0] sm:$0xff]
    %v1125 = vld [vmem:[#allocation2 + $0xa8] sm:$0xff]
    %v1126 = vld [vmem:[#allocation2 + $0xb0] sm:$0xff]
    %v1127 = vld [vmem:[#allocation2 + $0xb8] sm:$0xff]
    %v1128 = vld [vmem:[#allocation2 + $0xc0] sm:$0xff]
    %v1129 = vld [vmem:[#allocation2 + $0xc8] sm:$0xff]
    %v1130 = vld [vmem:[#allocation2 + $0xd0] sm:$0xff]
    %v1131 = vld [vmem:[#allocation2 + $0xd8] sm:$0xff]
    %v1132 = vld [vmem:[#allocation2 + $0xe0] sm:$0xff]
    %v1133 = vld [vmem:[#allocation2 + $0xe8] sm:$0xff]
    %v1134 = vld [vmem:[#allocation2 + $0xf0] sm:$0xff]
    %v1135 = vld [vmem:[#allocation2 + $0xf8] sm:$0xff]
    %v1136 = vld [vmem:[#allocation2 + $0x100] sm:$0xff]
    %v1137 = vld [vmem:[#allocation2 + $0x108] sm:$0xff]
    %v1138 = vld [vmem:[#allocation2 + $0x110] sm:$0xff]
    %v1139 = vld [vmem:[#allocation2 + $0x118] sm:$0xff]
    %v1140 = vld [vmem:[#allocation2 + $0x120] sm:$0xff]
    %v1141 = vld [vmem:[#allocation2 + $0x128] sm:$0xff]
    %v1142 = vld [vmem:[#allocation2 + $0x130] sm:$0xff]
    %v1143 = vld [vmem:[#allocation2 + $0x138] sm:$0xff]
    %v1144 = vld [vmem:[#allocation2 + $0x140] sm:$0xff]
    %v1145 = vld [vmem:[#allocation2 + $0x148] sm:$0xff]
    %v1146 = vld [vmem:[#allocation2 + $0x150] sm:$0xff]
    %v1147 = vld [vmem:[#allocation2 + $0x158] sm:$0xff]
    %v1148 = vld [vmem:[#allocation2 + $0x160] sm:$0xff]
    %v1149 = vld [vmem:[#allocation2 + $0x168] sm:$0xff]
    %v1150 = vld [vmem:[#allocation2 + $0x170] sm:$0xff]
    %v1151 = vld [vmem:[#allocation2 + $0x178] sm:$0xff]
    %v1152 = vld [vmem:[#allocation2 + $0x180] sm:$0xff]
    %v1153 = vld [vmem:[#allocation2 + $0x188] sm:$0xff]
    %v1154 = vld [vmem:[#allocation2 + $0x190] sm:$0xff]
    %v1155 = vld [vmem:[#allocation2 + $0x198] sm:$0xff]
    %v1156 = vld [vmem:[#allocation2 + $0x1a0] sm:$0xff]
    %v1157 = vld [vmem:[#allocation2 + $0x1a8] sm:$0xff]
    %v1158 = vld [vmem:[#allocation2 + $0x1b0] sm:$0xff]
    %v1159 = vld [vmem:[#allocation2 + $0x1b8] sm:$0xff]
    %v1160 = vld [vmem:[#allocation2 + $0x1c0] sm:$0xff]
    %v1161 = vld [vmem:[#allocation2 + $0x1c8] sm:$0xff]
    %v1162 = vld [vmem:[#allocation2 + $0x1d0] sm:$0xff]
    %v1163 = vld [vmem:[#allocation2 + $0x1d8] sm:$0xff]
    %v1164 = vld [vmem:[#allocation2 + $0x1e0] sm:$0xff]
    %v1165 = vld [vmem:[#allocation2 + $0x1e8] sm:$0xff]
    %v1166 = vld [vmem:[#allocation2 + $0x1f0] sm:$0xff]
    %v1167 = vld [vmem:[#allocation2 + $0x1f8] sm:$0xff]
    %v1168 = vld [vmem:[%s2] sm:$0x1]
    %v1170 = vlaneseq
    %v1171 = vshrl.u32 %v1170, 7
    %v1172 = vsub.s32 0, %v1171
    %v1173 = vrot.slane %v1168, %v1172
    %v1175 = vmul.f32 %v1104, %v1173
    %v1176 = vmul.f32 %v1105, %v1173
    %v1177 = vmul.f32 %v1106, %v1173
    %v1178 = vmul.f32 %v1107, %v1173
    %v1179 = vmul.f32 %v1108, %v1173
    %v1180 = vmul.f32 %v1109, %v1173
    %v1181 = vmul.f32 %v1110, %v1173
    %v1182 = vmul.f32 %v1111, %v1173
    %v1183 = vmul.f32 %v1112, %v1173
    %v1184 = vmul.f32 %v1113, %v1173
    %v1185 = vmul.f32 %v1114, %v1173
    %v1186 = vmul.f32 %v1115, %v1173
    %v1187 = vmul.f32 %v1116, %v1173
    %v1188 = vmul.f32 %v1117, %v1173
    %v1189 = vmul.f32 %v1118, %v1173
    %v1190 = vmul.f32 %v1119, %v1173
    %v1191 = vmul.f32 %v1120, %v1173
    %v1192 = vmul.f32 %v1121, %v1173
    %v1193 = vmul.f32 %v1122, %v1173
    %v1194 = vmul.f32 %v1123, %v1173
    %v1195 = vmul.f32 %v1124, %v1173
    %v1196 = vmul.f32 %v1125, %v1173
    %v1197 = vmul.f32 %v1126, %v1173
    %v1198 = vmul.f32 %v1127, %v1173
    %v1199 = vmul.f32 %v1128, %v1173
    %v1200 = vmul.f32 %v1129, %v1173
    %v1201 = vmul.f32 %v1130, %v1173
    %v1202 = vmul.f32 %v1131, %v1173
    %v1203 = vmul.f32 %v1132, %v1173
    %v1204 = vmul.f32 %v1133, %v1173
    %v1205 = vmul.f32 %v1134, %v1173
    %v1206 = vmul.f32 %v1135, %v1173
    %v1207 = vmul.f32 %v1136, %v1173
    %v1208 = vmul.f32 %v1137, %v1173
    %v1209 = vmul.f32 %v1138, %v1173
    %v1210 = vmul.f32 %v1139, %v1173
    %v1211 = vmul.f32 %v1140, %v1173
    %v1212 = vmul.f32 %v1141, %v1173
    %v1213 = vmul.f32 %v1142, %v1173
    %v1214 = vmul.f32 %v1143, %v1173
    %v1215 = vmul.f32 %v1144, %v1173
    %v1216 = vmul.f32 %v1145, %v1173
    %v1217 = vmul.f32 %v1146, %v1173
    %v1218 = vmul.f32 %v1147, %v1173
    %v1219 = vmul.f32 %v1148, %v1173
    %v1220 = vmul.f32 %v1149, %v1173
    %v1221 = vmul.f32 %v1150, %v1173
    %v1222 = vmul.f32 %v1151, %v1173
    %v1223 = vmul.f32 %v1152, %v1173
    %v1224 = vmul.f32 %v1153, %v1173
    %v1225 = vmul.f32 %v1154, %v1173
    %v1226 = vmul.f32 %v1155, %v1173
    %v1227 = vmul.f32 %v1156, %v1173
    %v1228 = vmul.f32 %v1157, %v1173
    %v1229 = vmul.f32 %v1158, %v1173
    %v1230 = vmul.f32 %v1159, %v1173
    %v1231 = vmul.f32 %v1160, %v1173
    %v1232 = vmul.f32 %v1161, %v1173
    %v1233 = vmul.f32 %v1162, %v1173
    %v1234 = vmul.f32 %v1163, %v1173
    %v1235 = vmul.f32 %v1164, %v1173
    %v1236 = vmul.f32 %v1165, %v1173
    %v1237 = vmul.f32 %v1166, %v1173
    %v1238 = vmul.f32 %v1167, %v1173
    %v1239 = vld [vmem:[%s3] sm:$0x1]
    %v1241 = vlaneseq
    %v1242 = vshrl.u32 %v1241, 7
    %v1243 = vsub.s32 0, %v1242
    %v1244 = vrot.slane %v1239, %v1243
    %v1246 = vadd.f32 %v1175, %v1244
    %v1247 = vadd.f32 %v1176, %v1244
    %v1248 = vadd.f32 %v1177, %v1244
    %v1249 = vadd.f32 %v1178, %v1244
    %v1250 = vadd.f32 %v1179, %v1244
    %v1251 = vadd.f32 %v1180, %v1244
    %v1252 = vadd.f32 %v1181, %v1244
    %v1253 = vadd.f32 %v1182, %v1244
    %v1254 = vadd.f32 %v1183, %v1244
    %v1255 = vadd.f32 %v1184, %v1244
    %v1256 = vadd.f32 %v1185, %v1244
    %v1257 = vadd.f32 %v1186, %v1244
    %v1258 = vadd.f32 %v1187, %v1244
    %v1259 = vadd.f32 %v1188, %v1244
    %v1260 = vadd.f32 %v1189, %v1244
    %v1261 = vadd.f32 %v1190, %v1244
    %v1262 = vadd.f32 %v1191, %v1244
    %v1263 = vadd.f32 %v1192, %v1244
    %v1264 = vadd.f32 %v1193, %v1244
    %v1265 = vadd.f32 %v1194, %v1244
    %v1266 = vadd.f32 %v1195, %v1244
    %v1267 = vadd.f32 %v1196, %v1244
    %v1268 = vadd.f32 %v1197, %v1244
    %v1269 = vadd.f32 %v1198, %v1244
    %v1270 = vadd.f32 %v1199, %v1244
    %v1271 = vadd.f32 %v1200, %v1244
    %v1272 = vadd.f32 %v1201, %v1244
    %v1273 = vadd.f32 %v1202, %v1244
    %v1274 = vadd.f32 %v1203, %v1244
    %v1275 = vadd.f32 %v1204, %v1244
    %v1276 = vadd.f32 %v1205, %v1244
    %v1277 = vadd.f32 %v1206, %v1244
    %v1278 = vadd.f32 %v1207, %v1244
    %v1279 = vadd.f32 %v1208, %v1244
    %v1280 = vadd.f32 %v1209, %v1244
    %v1281 = vadd.f32 %v1210, %v1244
    %v1282 = vadd.f32 %v1211, %v1244
    %v1283 = vadd.f32 %v1212, %v1244
    %v1284 = vadd.f32 %v1213, %v1244
    %v1285 = vadd.f32 %v1214, %v1244
    %v1286 = vadd.f32 %v1215, %v1244
    %v1287 = vadd.f32 %v1216, %v1244
    %v1288 = vadd.f32 %v1217, %v1244
    %v1289 = vadd.f32 %v1218, %v1244
    %v1290 = vadd.f32 %v1219, %v1244
    %v1291 = vadd.f32 %v1220, %v1244
    %v1292 = vadd.f32 %v1221, %v1244
    %v1293 = vadd.f32 %v1222, %v1244
    %v1294 = vadd.f32 %v1223, %v1244
    %v1295 = vadd.f32 %v1224, %v1244
    %v1296 = vadd.f32 %v1225, %v1244
    %v1297 = vadd.f32 %v1226, %v1244
    %v1298 = vadd.f32 %v1227, %v1244
    %v1299 = vadd.f32 %v1228, %v1244
    %v1300 = vadd.f32 %v1229, %v1244
    %v1301 = vadd.f32 %v1230, %v1244
    %v1302 = vadd.f32 %v1231, %v1244
    %v1303 = vadd.f32 %v1232, %v1244
    %v1304 = vadd.f32 %v1233, %v1244
    %v1305 = vadd.f32 %v1234, %v1244
    %v1306 = vadd.f32 %v1235, %v1244
    %v1307 = vadd.f32 %v1236, %v1244
    %v1308 = vadd.f32 %v1237, %v1244
    %v1309 = vadd.f32 %v1238, %v1244
    %v1310 = vmax.f32 %v1246, 0.0
    %v1311 = vmax.f32 %v1247, 0.0
    %v1312 = vmax.f32 %v1248, 0.0
    %v1313 = vmax.f32 %v1249, 0.0
    %v1314 = vmax.f32 %v1250, 0.0
    %v1315 = vmax.f32 %v1251, 0.0
    %v1316 = vmax.f32 %v1252, 0.0
    %v1317 = vmax.f32 %v1253, 0.0
    %v1318 = vmax.f32 %v1254, 0.0
    %v1319 = vmax.f32 %v1255, 0.0
    %v1320 = vmax.f32 %v1256, 0.0
    %v1321 = vmax.f32 %v1257, 0.0
    %v1322 = vmax.f32 %v1258, 0.0
    %v1323 = vmax.f32 %v1259, 0.0
    %v1324 = vmax.f32 %v1260, 0.0
    %v1325 = vmax.f32 %v1261, 0.0
    %v1326 = vmax.f32 %v1262, 0.0
    %v1327 = vmax.f32 %v1263, 0.0
    %v1328 = vmax.f32 %v1264, 0.0
    %v1329 = vmax.f32 %v1265, 0.0
    %v1330 = vmax.f32 %v1266, 0.0
    %v1331 = vmax.f32 %v1267, 0.0
    %v1332 = vmax.f32 %v1268, 0.0
    %v1333 = vmax.f32 %v1269, 0.0
    %v1334 = vmax.f32 %v1270, 0.0
    %v1335 = vmax.f32 %v1271, 0.0
    %v1336 = vmax.f32 %v1272, 0.0
    %v1337 = vmax.f32 %v1273, 0.0
    %v1338 = vmax.f32 %v1274, 0.0
    %v1339 = vmax.f32 %v1275, 0.0
    %v1340 = vmax.f32 %v1276, 0.0
    %v1341 = vmax.f32 %v1277, 0.0
    %v1342 = vmax.f32 %v1278, 0.0
    %v1343 = vmax.f32 %v1279, 0.0
    %v1344 = vmax.f32 %v1280, 0.0
    %v1345 = vmax.f32 %v1281, 0.0
    %v1346 = vmax.f32 %v1282, 0.0
    %v1347 = vmax.f32 %v1283, 0.0
    %v1348 = vmax.f32 %v1284, 0.0
    %v1349 = vmax.f32 %v1285, 0.0
    %v1350 = vmax.f32 %v1286, 0.0
    %v1351 = vmax.f32 %v1287, 0.0
    %v1352 = vmax.f32 %v1288, 0.0
    %v1353 = vmax.f32 %v1289, 0.0
    %v1354 = vmax.f32 %v1290, 0.0
    %v1355 = vmax.f32 %v1291, 0.0
    %v1356 = vmax.f32 %v1292, 0.0
    %v1357 = vmax.f32 %v1293, 0.0
    %v1358 = vmax.f32 %v1294, 0.0
    %v1359 = vmax.f32 %v1295, 0.0
    %v1360 = vmax.f32 %v1296, 0.0
    %v1361 = vmax.f32 %v1297, 0.0
    %v1362 = vmax.f32 %v1298, 0.0
    %v1363 = vmax.f32 %v1299, 0.0
    %v1364 = vmax.f32 %v1300, 0.0
    %v1365 = vmax.f32 %v1301, 0.0
    %v1366 = vmax.f32 %v1302, 0.0
    %v1367 = vmax.f32 %v1303, 0.0
    %v1368 = vmax.f32 %v1304, 0.0
    %v1369 = vmax.f32 %v1305, 0.0
    %v1370 = vmax.f32 %v1306, 0.0
    %v1371 = vmax.f32 %v1307, 0.0
    %v1372 = vmax.f32 %v1308, 0.0
    %v1373 = vmax.f32 %v1309, 0.0
    %v1374 = vpack.c.bf16 %v1311, %v1310
    %v1375 = vpack.c.bf16 %v1313, %v1312
    %v1376 = vpack.c.bf16 %v1315, %v1314
    %v1377 = vpack.c.bf16 %v1317, %v1316
    %v1378 = vpack.c.bf16 %v1319, %v1318
    %v1379 = vpack.c.bf16 %v1321, %v1320
    %v1380 = vpack.c.bf16 %v1323, %v1322
    %v1381 = vpack.c.bf16 %v1325, %v1324
    %v1382 = vpack.c.bf16 %v1327, %v1326
    %v1383 = vpack.c.bf16 %v1329, %v1328
    %v1384 = vpack.c.bf16 %v1331, %v1330
    %v1385 = vpack.c.bf16 %v1333, %v1332
    %v1386 = vpack.c.bf16 %v1335, %v1334
    %v1387 = vpack.c.bf16 %v1337, %v1336
    %v1388 = vpack.c.bf16 %v1339, %v1338
    %v1389 = vpack.c.bf16 %v1341, %v1340
    %v1390 = vpack.c.bf16 %v1343, %v1342
    %v1391 = vpack.c.bf16 %v1345, %v1344
    %v1392 = vpack.c.bf16 %v1347, %v1346
    %v1393 = vpack.c.bf16 %v1349, %v1348
    %v1394 = vpack.c.bf16 %v1351, %v1350
    %v1395 = vpack.c.bf16 %v1353, %v1352
    %v1396 = vpack.c.bf16 %v1355, %v1354
    %v1397 = vpack.c.bf16 %v1357, %v1356
    %v1398 = vpack.c.bf16 %v1359, %v1358
    %v1399 = vpack.c.bf16 %v1361, %v1360
    %v1400 = vpack.c.bf16 %v1363, %v1362
    %v1401 = vpack.c.bf16 %v1365, %v1364
    %v1402 = vpack.c.bf16 %v1367, %v1366
    %v1403 = vpack.c.bf16 %v1369, %v1368
    %v1404 = vpack.c.bf16 %v1371, %v1370
    %v1405 = vpack.c.bf16 %v1373, %v1372
    %v1438 = vunpack.c.l.b16 %v1374
    %v1439 = vunpack.c.h.b16 %v1374
    %v1440 = vunpack.c.l.b16 %v1375
    %v1441 = vunpack.c.h.b16 %v1375
    %v1442 = vunpack.c.l.b16 %v1376
    %v1443 = vunpack.c.h.b16 %v1376
    %v1444 = vunpack.c.l.b16 %v1377
    %v1445 = vunpack.c.h.b16 %v1377
    %v1446 = vunpack.c.l.b16 %v1378
    %v1447 = vunpack.c.h.b16 %v1378
    %v1448 = vunpack.c.l.b16 %v1379
    %v1449 = vunpack.c.h.b16 %v1379
    %v1450 = vunpack.c.l.b16 %v1380
    %v1451 = vunpack.c.h.b16 %v1380
    %v1452 = vunpack.c.l.b16 %v1381
    %v1453 = vunpack.c.h.b16 %v1381
    %v1454 = vunpack.c.l.b16 %v1382
    %v1455 = vunpack.c.h.b16 %v1382
    %v1456 = vunpack.c.l.b16 %v1383
    %v1457 = vunpack.c.h.b16 %v1383
    %v1458 = vunpack.c.l.b16 %v1384
    %v1459 = vunpack.c.h.b16 %v1384
    %v1460 = vunpack.c.l.b16 %v1385
    %v1461 = vunpack.c.h.b16 %v1385
    %v1462 = vunpack.c.l.b16 %v1386
    %v1463 = vunpack.c.h.b16 %v1386
    %v1464 = vunpack.c.l.b16 %v1387
    %v1465 = vunpack.c.h.b16 %v1387
    %v1466 = vunpack.c.l.b16 %v1388
    %v1467 = vunpack.c.h.b16 %v1388
    %v1468 = vunpack.c.l.b16 %v1389
    %v1469 = vunpack.c.h.b16 %v1389
    %v1470 = vunpack.c.l.b16 %v1390
    %v1471 = vunpack.c.h.b16 %v1390
    %v1472 = vunpack.c.l.b16 %v1391
    %v1473 = vunpack.c.h.b16 %v1391
    %v1474 = vunpack.c.l.b16 %v1392
    %v1475 = vunpack.c.h.b16 %v1392
    %v1476 = vunpack.c.l.b16 %v1393
    %v1477 = vunpack.c.h.b16 %v1393
    %v1478 = vunpack.c.l.b16 %v1394
    %v1479 = vunpack.c.h.b16 %v1394
    %v1480 = vunpack.c.l.b16 %v1395
    %v1481 = vunpack.c.h.b16 %v1395
    %v1482 = vunpack.c.l.b16 %v1396
    %v1483 = vunpack.c.h.b16 %v1396
    %v1484 = vunpack.c.l.b16 %v1397
    %v1485 = vunpack.c.h.b16 %v1397
    %v1486 = vunpack.c.l.b16 %v1398
    %v1487 = vunpack.c.h.b16 %v1398
    %v1488 = vunpack.c.l.b16 %v1399
    %v1489 = vunpack.c.h.b16 %v1399
    %v1490 = vunpack.c.l.b16 %v1400
    %v1491 = vunpack.c.h.b16 %v1400
    %v1492 = vunpack.c.l.b16 %v1401
    %v1493 = vunpack.c.h.b16 %v1401
    %v1494 = vunpack.c.l.b16 %v1402
    %v1495 = vunpack.c.h.b16 %v1402
    %v1496 = vunpack.c.l.b16 %v1403
    %v1497 = vunpack.c.h.b16 %v1403
    %v1498 = vunpack.c.l.b16 %v1404
    %v1499 = vunpack.c.h.b16 %v1404
    %v1500 = vunpack.c.l.b16 %v1405
    %v1501 = vunpack.c.h.b16 %v1405
    %v1502 = vpack.c.b16 %v1438, %v1438
    %v1503 = vpack.c.b16 %v1439, %v1439
    %v1504 = vpack.c.b16 %v1440, %v1440
    %v1505 = vpack.c.b16 %v1441, %v1441
    %v1506 = vpack.c.b16 %v1442, %v1442
    %v1507 = vpack.c.b16 %v1443, %v1443
    %v1508 = vpack.c.b16 %v1444, %v1444
    %v1509 = vpack.c.b16 %v1445, %v1445
    %v1510 = vpack.c.b16 %v1446, %v1446
    %v1511 = vpack.c.b16 %v1447, %v1447
    %v1512 = vpack.c.b16 %v1448, %v1448
    %v1513 = vpack.c.b16 %v1449, %v1449
    %v1514 = vpack.c.b16 %v1450, %v1450
    %v1515 = vpack.c.b16 %v1451, %v1451
    %v1516 = vpack.c.b16 %v1452, %v1452
    %v1517 = vpack.c.b16 %v1453, %v1453
    %v1518 = vpack.c.b16 %v1454, %v1454
    %v1519 = vpack.c.b16 %v1455, %v1455
    %v1520 = vpack.c.b16 %v1456, %v1456
    %v1521 = vpack.c.b16 %v1457, %v1457
    %v1522 = vpack.c.b16 %v1458, %v1458
    %v1523 = vpack.c.b16 %v1459, %v1459
    %v1524 = vpack.c.b16 %v1460, %v1460
    %v1525 = vpack.c.b16 %v1461, %v1461
    %v1526 = vpack.c.b16 %v1462, %v1462
    %v1527 = vpack.c.b16 %v1463, %v1463
    %v1528 = vpack.c.b16 %v1464, %v1464
    %v1529 = vpack.c.b16 %v1465, %v1465
    %v1530 = vpack.c.b16 %v1466, %v1466
    %v1531 = vpack.c.b16 %v1467, %v1467
    %v1532 = vpack.c.b16 %v1468, %v1468
    %v1533 = vpack.c.b16 %v1469, %v1469
    %v1534 = vpack.c.b16 %v1470, %v1470
    %v1535 = vpack.c.b16 %v1471, %v1471
    %v1536 = vpack.c.b16 %v1472, %v1472
    %v1537 = vpack.c.b16 %v1473, %v1473
    %v1538 = vpack.c.b16 %v1474, %v1474
    %v1539 = vpack.c.b16 %v1475, %v1475
    %v1540 = vpack.c.b16 %v1476, %v1476
    %v1541 = vpack.c.b16 %v1477, %v1477
    %v1542 = vpack.c.b16 %v1478, %v1478
    %v1543 = vpack.c.b16 %v1479, %v1479
    %v1544 = vpack.c.b16 %v1480, %v1480
    %v1545 = vpack.c.b16 %v1481, %v1481
    %v1546 = vpack.c.b16 %v1482, %v1482
    %v1547 = vpack.c.b16 %v1483, %v1483
    %v1548 = vpack.c.b16 %v1484, %v1484
    %v1549 = vpack.c.b16 %v1485, %v1485
    %v1550 = vpack.c.b16 %v1486, %v1486
    %v1551 = vpack.c.b16 %v1487, %v1487
    %v1552 = vpack.c.b16 %v1488, %v1488
    %v1553 = vpack.c.b16 %v1489, %v1489
    %v1554 = vpack.c.b16 %v1490, %v1490
    %v1555 = vpack.c.b16 %v1491, %v1491
    %v1556 = vpack.c.b16 %v1492, %v1492
    %v1557 = vpack.c.b16 %v1493, %v1493
    %v1558 = vpack.c.b16 %v1494, %v1494
    %v1559 = vpack.c.b16 %v1495, %v1495
    %v1560 = vpack.c.b16 %v1496, %v1496
    %v1561 = vpack.c.b16 %v1497, %v1497
    %v1562 = vpack.c.b16 %v1498, %v1498
    %v1563 = vpack.c.b16 %v1499, %v1499
    %v1564 = vpack.c.b16 %v1500, %v1500
    %v1565 = vpack.c.b16 %v1501, %v1501
    %vm1630 = vcmask 519168
    %1631 = vst.msk [vmem:[%s4] sm:$0xf] %vm1630, %v1502
    %1632 = vst.msk [vmem:[%s4 + $0x4] sm:$0xf] %vm1630, %v1503
    %1633 = vst.msk [vmem:[%s4 + $0x8] sm:$0xf] %vm1630, %v1504
    %1634 = vst.msk [vmem:[%s4 + $0xc] sm:$0xf] %vm1630, %v1505
    %1635 = vst.msk [vmem:[%s4 + $0x10] sm:$0xf] %vm1630, %v1506
    %1636 = vst.msk [vmem:[%s4 + $0x14] sm:$0xf] %vm1630, %v1507
    %1637 = vst.msk [vmem:[%s4 + $0x18] sm:$0xf] %vm1630, %v1508
    %1638 = vst.msk [vmem:[%s4 + $0x1c] sm:$0xf] %vm1630, %v1509
    %1639 = vst.msk [vmem:[%s4 + $0x20] sm:$0xf] %vm1630, %v1510
    %1640 = vst.msk [vmem:[%s4 + $0x24] sm:$0xf] %vm1630, %v1511
    %1641 = vst.msk [vmem:[%s4 + $0x28] sm:$0xf] %vm1630, %v1512
    %1642 = vst.msk [vmem:[%s4 + $0x2c] sm:$0xf] %vm1630, %v1513
    %1643 = vst.msk [vmem:[%s4 + $0x30] sm:$0xf] %vm1630, %v1514
    %1644 = vst.msk [vmem:[%s4 + $0x34] sm:$0xf] %vm1630, %v1515
    %1645 = vst.msk [vmem:[%s4 + $0x38] sm:$0xf] %vm1630, %v1516
    %1646 = vst.msk [vmem:[%s4 + $0x3c] sm:$0xf] %vm1630, %v1517
    %1647 = vst.msk [vmem:[%s4 + $0x40] sm:$0xf] %vm1630, %v1518
    %1648 = vst.msk [vmem:[%s4 + $0x44] sm:$0xf] %vm1630, %v1519
    %1649 = vst.msk [vmem:[%s4 + $0x48] sm:$0xf] %vm1630, %v1520
    %1650 = vst.msk [vmem:[%s4 + $0x4c] sm:$0xf] %vm1630, %v1521
    %1651 = vst.msk [vmem:[%s4 + $0x50] sm:$0xf] %vm1630, %v1522
    %1652 = vst.msk [vmem:[%s4 + $0x54] sm:$0xf] %vm1630, %v1523
    %1653 = vst.msk [vmem:[%s4 + $0x58] sm:$0xf] %vm1630, %v1524
    %1654 = vst.msk [vmem:[%s4 + $0x5c] sm:$0xf] %vm1630, %v1525
    %1655 = vst.msk [vmem:[%s4 + $0x60] sm:$0xf] %vm1630, %v1526
    %1656 = vst.msk [vmem:[%s4 + $0x64] sm:$0xf] %vm1630, %v1527
    %1657 = vst.msk [vmem:[%s4 + $0x68] sm:$0xf] %vm1630, %v1528
    %1658 = vst.msk [vmem:[%s4 + $0x6c] sm:$0xf] %vm1630, %v1529
    %1659 = vst.msk [vmem:[%s4 + $0x70] sm:$0xf] %vm1630, %v1530
    %1660 = vst.msk [vmem:[%s4 + $0x74] sm:$0xf] %vm1630, %v1531
    %1661 = vst.msk [vmem:[%s4 + $0x78] sm:$0xf] %vm1630, %v1532
    %1662 = vst.msk [vmem:[%s4 + $0x7c] sm:$0xf] %vm1630, %v1533
    %1663 = vst.msk [vmem:[%s4 + $0x80] sm:$0xf] %vm1630, %v1534
    %1664 = vst.msk [vmem:[%s4 + $0x84] sm:$0xf] %vm1630, %v1535
    %1665 = vst.msk [vmem:[%s4 + $0x88] sm:$0xf] %vm1630, %v1536
    %1666 = vst.msk [vmem:[%s4 + $0x8c] sm:$0xf] %vm1630, %v1537
    %1667 = vst.msk [vmem:[%s4 + $0x90] sm:$0xf] %vm1630, %v1538
    %1668 = vst.msk [vmem:[%s4 + $0x94] sm:$0xf] %vm1630, %v1539
    %1669 = vst.msk [vmem:[%s4 + $0x98] sm:$0xf] %vm1630, %v1540
    %1670 = vst.msk [vmem:[%s4 + $0x9c] sm:$0xf] %vm1630, %v1541
    %1671 = vst.msk [vmem:[%s4 + $0xa0] sm:$0xf] %vm1630, %v1542
    %1672 = vst.msk [vmem:[%s4 + $0xa4] sm:$0xf] %vm1630, %v1543
    %1673 = vst.msk [vmem:[%s4 + $0xa8] sm:$0xf] %vm1630, %v1544
    %1674 = vst.msk [vmem:[%s4 + $0xac] sm:$0xf] %vm1630, %v1545
    %1675 = vst.msk [vmem:[%s4 + $0xb0] sm:$0xf] %vm1630, %v1546
    %1676 = vst.msk [vmem:[%s4 + $0xb4] sm:$0xf] %vm1630, %v1547
    %1677 = vst.msk [vmem:[%s4 + $0xb8] sm:$0xf] %vm1630, %v1548
    %1678 = vst.msk [vmem:[%s4 + $0xbc] sm:$0xf] %vm1630, %v1549
    %1679 = vst.msk [vmem:[%s4 + $0xc0] sm:$0xf] %vm1630, %v1550
    %1680 = vst.msk [vmem:[%s4 + $0xc4] sm:$0xf] %vm1630, %v1551
    %1681 = vst.msk [vmem:[%s4 + $0xc8] sm:$0xf] %vm1630, %v1552
    %1682 = vst.msk [vmem:[%s4 + $0xcc] sm:$0xf] %vm1630, %v1553
    %1683 = vst.msk [vmem:[%s4 + $0xd0] sm:$0xf] %vm1630, %v1554
    %1684 = vst.msk [vmem:[%s4 + $0xd4] sm:$0xf] %vm1630, %v1555
    %1685 = vst.msk [vmem:[%s4 + $0xd8] sm:$0xf] %vm1630, %v1556
    %1686 = vst.msk [vmem:[%s4 + $0xdc] sm:$0xf] %vm1630, %v1557
    %1687 = vst.msk [vmem:[%s4 + $0xe0] sm:$0xf] %vm1630, %v1558
    %1688 = vst.msk [vmem:[%s4 + $0xe4] sm:$0xf] %vm1630, %v1559
    %1689 = vst.msk [vmem:[%s4 + $0xe8] sm:$0xf] %vm1630, %v1560
    %1690 = vst.msk [vmem:[%s4 + $0xec] sm:$0xf] %vm1630, %v1561
    %1691 = vst.msk [vmem:[%s4 + $0xf0] sm:$0xf] %vm1630, %v1562
    %1692 = vst.msk [vmem:[%s4 + $0xf4] sm:$0xf] %vm1630, %v1563
    %1693 = vst.msk [vmem:[%s4 + $0xf8] sm:$0xf] %vm1630, %v1564
    %1694 = vst.msk [vmem:[%s4 + $0xfc] sm:$0xf] %vm1630, %v1565
  $region25: #{stem_forward.1} parent=0 // pred_fallthru
    _
  // Predicated region
  $region26: #{stem_forward.1} parent=0 // pred_check
    _
  $region27: #{stem_forward.1} parent=0 // pred_check_branch
    %1696 = sbr.rel (0) target = $region29
  $region28: #{stem_forward.1} parent=0 // pred_region
    _
  $region29: #{stem_forward.1} parent=0 // pred_fallthru
    _
  // Predicated region
  $region30: #{stem_forward.1} parent=0 // pred_check
    _
  $region31: #{stem_forward.1} parent=0 // pred_check_branch
    %1698 = sbr.rel (0) target = $region33
  $region32: #{stem_forward.1} parent=0 // pred_region
    _
  $region33: #{stem_forward.1} parent=0 // pred_fallthru
    _

</llo_original>
